<compile_context>
chip_gen: v5e
topology: v5e:2x2
jax: 0.10.0
libtpu: 0.0.40
codegen_flags: <defaults>
</compile_context>

<pallas_src>
import numpy as np
import jax
import jax.numpy as jnp
from jax.experimental import pallas as pl
from jax.experimental.pallas import tpu as pltpu


# --------------------------------------------------------------------------- #
# Kernel
# --------------------------------------------------------------------------- #
def _fu_kernel(fu_ref, fd_ref, w1_ref, b1_ref, w2_ref, b2_ref, a2_ref,
               m3_ref, b3_ref, a3_ref, out_ref):
    cin = w1_ref.shape[0]            # pconv1 output channels
    cout = w2_ref.shape[0]           # pconv2 output channels
    F = fu_ref.shape[0] // cin       # frequency bins (input side)
    tT = fu_ref.shape[-1]            # lane tile along T

    fu = fu_ref[...]                 # (cin*F, tT), channel c = rows [c*F,(c+1)*F)
    fd = fd_ref[...]

    def ch(x, c):                    # (F, tT) slice of channel c
        return x[c * F:(c + 1) * F, :]

    # ---- pconv1: 1x1 conv over channels (+folded BN) -> tanh -> gate by fd (VPU) ----
    z1 = []
    for c in range(cin):
        acc = jnp.zeros((F, tT), jnp.float32)
        for k in range(cin):                     # cat([fu, fd]): first cin chans = fu
            acc = acc + w1_ref[c, k] * ch(fu, k)
        for k in range(cin):                     # next cin chans = fd
            acc = acc + w1_ref[c, cin + k] * ch(fd, k)
        z1.append(jnp.tanh(acc + b1_ref[c]) * ch(fd, c))

    # ---- pconv2: 1x1 conv (+folded BN) -> PReLU (VPU) ----
    z2 = []
    for c in range(cout):
        acc = jnp.zeros((F, tT), jnp.float32)
        for k in range(cin):
            acc = acc + w2_ref[c, k] * z1[k]
        acc = acc + b2_ref[c]
        z2.append(jnp.maximum(acc, 0.0) + a2_ref[c] * jnp.minimum(acc, 0.0))

    # ---- conv3: grouped ConvTranspose2d along F (+folded BN) as one banded matmul ----
    z_all = jnp.concatenate(z2, axis=0)                                   # (cout*F, tT)
    y = jnp.dot(m3_ref[...], z_all, preferred_element_type=jnp.float32)   # (cout*Fo, tT)
    y = y + b3_ref[...]                                                   # per-row bias
    y = jnp.maximum(y, 0.0) + a3_ref[...] * jnp.minimum(y, 0.0)           # per-row PReLU
    out_ref[...] = y.astype(out_ref.dtype)


# --------------------------------------------------------------------------- #
# Wrapper
# --------------------------------------------------------------------------- #
def fu_forward(fu, fd, p, *, tile_t=1024, eps=1e-5):
    """fu, fd: (B, cin, F, T) float32.  Returns (B, cout, 4*F, T) float32."""
    B, cin, F, T = fu.shape
    cout = p["w2"].shape[0]
    groups = 2
    go = cout // groups
    gi = cout // groups
    KF, SF, PF, OF = 7, 4, 2, 1                       # frequency-axis K/S/P/output_padding
    Fo = (F - 1) * SF - 2 * PF + KF + OF              # = 4*F
    f32 = jnp.float32

    # --- fold inference BatchNorm into the preceding conv ---
    s1 = p["g1"] / jnp.sqrt(p["rv1"] + eps)
    w1f = (s1[:, None] * p["w1"]).astype(f32)                       # (cin, 2*cin)
    b1f = (s1 * (p["b1"] - p["rm1"]) + p["bt1"]).astype(f32)

    s2 = p["g2"] / jnp.sqrt(p["rv2"] + eps)
    w2f = (s2[:, None] * p["w2"]).astype(f32)                       # (cout, cin)
    b2f = (s2 * (p["b2"] - p["rm2"]) + p["bt2"]).astype(f32)

    s3 = p["g3"] / jnp.sqrt(p["rv3"] + eps)
    co_of = (jnp.arange(cout)[:, None] // gi) * go + jnp.arange(go)[None, :]
    w3f = (p["w3"] * s3[co_of][:, :, None]).astype(f32)             # (cout, go, KF)
    b3f = (s3 * (p["b3"] - p["rm3"]) + p["bt3"]).astype(f32)

    # --- pre-lower grouped transposed conv along F into one banded matrix ---
    sel = np.zeros((Fo, F, KF), np.float32)
    for r in range(Fo):
        for j in range(F):
            k = r + PF - SF * j
            if 0 <= k < KF:
                sel[r, j, k] = 1.0
    sel = jnp.asarray(sel)
    m3 = jnp.zeros((cout * Fo, cout * F), f32)
    for co in range(cout):
        g, col = divmod(co, go)
        for ci_l in range(gi):
            ci = g * gi + ci_l
            blk = jnp.einsum("rjk,k->rj", sel, w3f[ci, col])
            m3 = m3.at[co * Fo:(co + 1) * Fo, ci * F:(ci + 1) * F].set(blk)
    b3_rows = jnp.repeat(b3f, Fo)[:, None].astype(f32)              # (cout*Fo, 1)
    a3_rows = jnp.repeat(p["a3"].astype(f32), Fo)[:, None]          # (cout*Fo, 1)
    a2 = p["a2"].astype(f32)

    # --- lane-dense layout: (B, C, F, T) -> (B, C*F, T)  (free reshape, no transpose) ---
    fu2 = fu.astype(f32).reshape(B, cin * F, T)
    fd2 = fd.astype(f32).reshape(B, cin * F, T)

    # --- T tiling: 128-lane multiples, cdiv grid + zero padding for the tail ---
    t_aligned = ((T + 127) // 128) * 128
    tile = max(128, min((tile_t // 128) * 128, t_aligned))
    n_t = pl.cdiv(t_aligned, tile)
    t_pad = n_t * tile
    if t_pad != T:
        pad = ((0, 0), (0, 0), (0, t_pad - T))
        fu2 = jnp.pad(fu2, pad)
        fd2 = jnp.pad(fd2, pad)

    out = pl.pallas_call(
        _fu_kernel,
        out_shape=jax.ShapeDtypeStruct((B, cout * Fo, t_pad), f32),
        grid=(B, n_t),
        in_specs=[
            pl.BlockSpec((None, cin * F, tile), lambda b, t: (b, 0, t)),   # fu
            pl.BlockSpec((None, cin * F, tile), lambda b, t: (b, 0, t)),   # fd
            pl.BlockSpec(memory_space=pltpu.MemorySpace.SMEM),             # w1f
            pl.BlockSpec(memory_space=pltpu.MemorySpace.SMEM),             # b1f
            pl.BlockSpec(memory_space=pltpu.MemorySpace.SMEM),             # w2f
            pl.BlockSpec(memory_space=pltpu.MemorySpace.SMEM),             # b2f
            pl.BlockSpec(memory_space=pltpu.MemorySpace.SMEM),             # a2
            pl.BlockSpec((cout * Fo, cout * F), lambda b, t: (0, 0)),      # m3
            pl.BlockSpec((cout * Fo, 1), lambda b, t: (0, 0)),             # b3 rows
            pl.BlockSpec((cout * Fo, 1), lambda b, t: (0, 0)),             # a3 rows
        ],
        out_specs=pl.BlockSpec((None, cout * Fo, tile), lambda b, t: (b, 0, t)),
        compiler_params=pltpu.CompilerParams(
            dimension_semantics=("parallel", "parallel"),
            vmem_limit_bytes=32 * 1024 * 1024),
    )(fu2, fd2, w1f, b1f, w2f, b2f, a2, m3, b3_rows, a3_rows)

    if t_pad != T:
        out = out[:, :, :T]
    return out.reshape(B, cout, Fo, T)        # free reshape (split adjacent dims)


# --------------------------------------------------------------------------- #
# Pure-JAX reference (inference-mode BN), matching PyTorch semantics
# --------------------------------------------------------------------------- #
def _prelu(x, a):
    return jnp.where(x >= 0, x, a[None, :, None, None] * x)


def _bn(x, g, b, rm, rv, eps=1e-5):
    s = (g / jnp.sqrt(rv + eps))[None, :, None, None]
    return (x - rm[None, :, None, None]) * s + b[None, :, None, None]


def _conv1x1(x, w, b):
    return jnp.einsum("bcft,oc->boft", x, w) + b[None, :, None, None]


def _conv_transpose_f_grouped(x, w, b, groups=2, KF=7, SF=4, PF=2, OF=1):
    B, C, F, T = x.shape
    go = w.shape[1]
    gi = C // groups
    Fo = (F - 1) * SF - 2 * PF + KF + OF
    chans = []
    for co in range(go * groups):
        g, col = divmod(co, go)
        rows = []
        for r in range(Fo):
            acc = jnp.zeros((B, T), jnp.float32)
            for ci_l in range(gi):
                ci = g * gi + ci_l
                for k in range(KF):
                    num = r + PF - k
                    if num % SF == 0:
                        j = num // SF
                        if 0 <= j < F:
                            acc = acc + w[ci, col, k] * x[:, ci, j, :]
            rows.append(acc + b[co])
        chans.append(jnp.stack(rows, axis=1))
    return jnp.stack(chans, axis=1)


def fu_reference(fu, fd, p, eps=1e-5):
    x = jnp.concatenate([fu, fd], axis=1)
    y = jnp.tanh(_bn(_conv1x1(x, p["w1"], p["b1"]),
                     p["g1"], p["bt1"], p["rm1"], p["rv1"], eps)) * fd
    y = _prelu(_bn(_conv1x1(y, p["w2"], p["b2"]),
                   p["g2"], p["bt2"], p["rm2"], p["rv2"], eps), p["a2"])
    y = _conv_transpose_f_grouped(y, p["w3"], p["b3"])
    y = _prelu(_bn(y, p["g3"], p["bt3"], p["rm3"], p["rv3"], eps), p["a3"])
    return y


# --------------------------------------------------------------------------- #
if __name__ == "__main__":
    cin, cout = 4, 4
    B, F, T = 2, 8, 200                # T deliberately not a multiple of 128 (tail path)

    key = jax.random.PRNGKey(0)
    ks = jax.random.split(key, 24)
    _i = iter(range(24))

    def nrm(shape, scale=0.2):
        return (scale * jax.random.normal(ks[next(_i)], shape)).astype(jnp.float32)

    def pos(shape, lo=0.5, hi=1.5):
        return jax.random.uniform(ks[next(_i)], shape, jnp.float32, lo, hi)

    params = {
        # pconv1: Conv2d(2*cin, cin, 1x1) + BN(cin)
        "w1": nrm((cin, 2 * cin)), "b1": nrm((cin,), 0.1),
        "g1": pos((cin,)), "bt1": nrm((cin,), 0.1), "rm1": nrm((cin,), 0.1), "rv1": pos((cin,)),
        # pconv2: Conv2d(cin, cout, 1x1) + BN(cout) + PReLU(cout)
        "w2": nrm((cout, cin)), "b2": nrm((cout,), 0.1),
        "g2": pos((cout,)), "bt2": nrm((cout,), 0.1), "rm2": nrm((cout,), 0.1), "rv2": pos((cout,)),
        "a2": pos((cout,), 0.1, 0.4),
        # conv3: ConvTranspose2d(cout, cout, (7,1), (4,1), (2,0), (1,0), groups=2) + BN + PReLU
        "w3": nrm((cout, cout // 2, 7)), "b3": nrm((cout,), 0.1),
        "g3": pos((cout,)), "bt3": nrm((cout,), 0.1), "rm3": nrm((cout,), 0.1), "rv3": pos((cout,)),
        "a3": pos((cout,), 0.1, 0.4),
    }

    fu_in = jax.random.normal(ks[next(_i)], (B, cin, F, T), jnp.float32)
    fd_in = jax.random.normal(ks[next(_i)], (B, cin, F, T), jnp.float32)

    out = fu_forward(fu_in, fd_in, params, tile_t=1024)
    out = jax.block_until_ready(out)

    ref = fu_reference(fu_in, fd_in, params)
    assert out.shape == (B, cout, 4 * F, T), out.shape
    max_err = float(jnp.max(jnp.abs(out - ref)))
    assert jnp.allclose(out, ref, atol=1e-4, rtol=1e-4), f"mismatch vs reference (max abs err {max_err})"

    print("KERNEL_OK")
</pallas_src>

<mosaic_0001>
module attributes {stable_mosaic.version = 11 : i64} {
  func.func @_fu_kernel(%arg0: i32, %arg1: i32, %arg2: memref<1x32x256xf32, #tpu.memory_space<vmem>>, %arg3: memref<1x32x256xf32, #tpu.memory_space<vmem>>, %arg4: memref<4x8xf32, #tpu.memory_space<smem>>, %arg5: memref<4xf32, #tpu.memory_space<smem>>, %arg6: memref<4x4xf32, #tpu.memory_space<smem>>, %arg7: memref<4xf32, #tpu.memory_space<smem>>, %arg8: memref<4xf32, #tpu.memory_space<smem>>, %arg9: memref<128x32xf32, #tpu.memory_space<vmem>>, %arg10: memref<128x1xf32, #tpu.memory_space<vmem>>, %arg11: memref<128x1xf32, #tpu.memory_space<vmem>>, %arg12: memref<1x128x256xf32, #tpu.memory_space<vmem>>) attributes {dimension_semantics = [#tpu.dimension_semantics<parallel>, #tpu.dimension_semantics<parallel>], iteration_bounds = array<i64: 2, 1>, scalar_prefetch = 0 : i64, scratch_operands = 0 : i64, tpu.core_type = #tpu.core_type<tc>, window_params = [{transform_indices = @transform_0, window_bounds = array<i64: 1, 32, 256>}, {transform_indices = @transform_1, window_bounds = array<i64: 1, 32, 256>}, {transform_indices = @transform_2, window_bounds = array<i64: 4, 8>}, {transform_indices = @transform_3, window_bounds = array<i64: 4>}, {transform_indices = @transform_4, window_bounds = array<i64: 4, 4>}, {transform_indices = @transform_5, window_bounds = array<i64: 4>}, {transform_indices = @transform_6, window_bounds = array<i64: 4>}, {pipeline_mode = #tpu.pipeline_mode<synchronous>, transform_indices = @transform_7, window_bounds = array<i64: 128, 32>}, {pipeline_mode = #tpu.pipeline_mode<synchronous>, transform_indices = @transform_8, window_bounds = array<i64: 128, 1>}, {pipeline_mode = #tpu.pipeline_mode<synchronous>, transform_indices = @transform_9, window_bounds = array<i64: 128, 1>}, {transform_indices = @transform_10, window_bounds = array<i64: 1, 128, 256>}]} {
    %c0 = arith.constant 0 : index
    %c0_0 = arith.constant 0 : index
    %c0_1 = arith.constant 0 : index
    %0 = vector.load %arg2[%c0, %c0_0, %c0_1] : memref<1x32x256xf32, #tpu.memory_space<vmem>>, vector<1x32x256xf32>
    %1 = vector.shape_cast %0 : vector<1x32x256xf32> to vector<32x256xf32>
    %c0_2 = arith.constant 0 : index
    %c0_3 = arith.constant 0 : index
    %c0_4 = arith.constant 0 : index
    %2 = vector.load %arg3[%c0_2, %c0_3, %c0_4] : memref<1x32x256xf32, #tpu.memory_space<vmem>>, vector<1x32x256xf32>
    %3 = vector.shape_cast %2 : vector<1x32x256xf32> to vector<32x256xf32>
    %cst = arith.constant 0.000000e+00 : f32
    %4 = vector.broadcast %cst : f32 to vector<8x256xf32>
    %c0_5 = arith.constant 0 : index
    %c0_6 = arith.constant 0 : index
    %5 = memref.load %arg4[%c0_5, %c0_6] : memref<4x8xf32, #tpu.memory_space<smem>>
    %6 = vector.extract_strided_slice %1 {offsets = [0, 0], sizes = [8, 256], strides = [1, 1]} : vector<32x256xf32> to vector<8x256xf32>
    %7 = vector.broadcast %5 : f32 to vector<8x256xf32>
    %8 = arith.mulf %7, %6 : vector<8x256xf32>
    %9 = arith.addf %4, %8 : vector<8x256xf32>
    %c0_7 = arith.constant 0 : index
    %c1 = arith.constant 1 : index
    %10 = memref.load %arg4[%c0_7, %c1] : memref<4x8xf32, #tpu.memory_space<smem>>
    %11 = vector.extract_strided_slice %1 {offsets = [8, 0], sizes = [8, 256], strides = [1, 1]} : vector<32x256xf32> to vector<8x256xf32>
    %12 = vector.broadcast %10 : f32 to vector<8x256xf32>
    %13 = arith.mulf %12, %11 : vector<8x256xf32>
    %14 = arith.addf %9, %13 : vector<8x256xf32>
    %c0_8 = arith.constant 0 : index
    %c2 = arith.constant 2 : index
    %15 = memref.load %arg4[%c0_8, %c2] : memref<4x8xf32, #tpu.memory_space<smem>>
    %16 = vector.extract_strided_slice %1 {offsets = [16, 0], sizes = [8, 256], strides = [1, 1]} : vector<32x256xf32> to vector<8x256xf32>
    %17 = vector.broadcast %15 : f32 to vector<8x256xf32>
    %18 = arith.mulf %17, %16 : vector<8x256xf32>
    %19 = arith.addf %14, %18 : vector<8x256xf32>
    %c0_9 = arith.constant 0 : index
    %c3 = arith.constant 3 : index
    %20 = memref.load %arg4[%c0_9, %c3] : memref<4x8xf32, #tpu.memory_space<smem>>
    %21 = vector.extract_strided_slice %1 {offsets = [24, 0], sizes = [8, 256], strides = [1, 1]} : vector<32x256xf32> to vector<8x256xf32>
    %22 = vector.broadcast %20 : f32 to vector<8x256xf32>
    %23 = arith.mulf %22, %21 : vector<8x256xf32>
    %24 = arith.addf %19, %23 : vector<8x256xf32>
    %c0_10 = arith.constant 0 : index
    %c4 = arith.constant 4 : index
    %25 = memref.load %arg4[%c0_10, %c4] : memref<4x8xf32, #tpu.memory_space<smem>>
    %26 = vector.extract_strided_slice %3 {offsets = [0, 0], sizes = [8, 256], strides = [1, 1]} : vector<32x256xf32> to vector<8x256xf32>
    %27 = vector.broadcast %25 : f32 to vector<8x256xf32>
    %28 = arith.mulf %27, %26 : vector<8x256xf32>
    %29 = arith.addf %24, %28 : vector<8x256xf32>
    %c0_11 = arith.constant 0 : index
    %c5 = arith.constant 5 : index
    %30 = memref.load %arg4[%c0_11, %c5] : memref<4x8xf32, #tpu.memory_space<smem>>
    %31 = vector.extract_strided_slice %3 {offsets = [8, 0], sizes = [8, 256], strides = [1, 1]} : vector<32x256xf32> to vector<8x256xf32>
    %32 = vector.broadcast %30 : f32 to vector<8x256xf32>
    %33 = arith.mulf %32, %31 : vector<8x256xf32>
    %34 = arith.addf %29, %33 : vector<8x256xf32>
    %c0_12 = arith.constant 0 : index
    %c6 = arith.constant 6 : index
    %35 = memref.load %arg4[%c0_12, %c6] : memref<4x8xf32, #tpu.memory_space<smem>>
    %36 = vector.extract_strided_slice %3 {offsets = [16, 0], sizes = [8, 256], strides = [1, 1]} : vector<32x256xf32> to vector<8x256xf32>
    %37 = vector.broadcast %35 : f32 to vector<8x256xf32>
    %38 = arith.mulf %37, %36 : vector<8x256xf32>
    %39 = arith.addf %34, %38 : vector<8x256xf32>
    %c0_13 = arith.constant 0 : index
    %c7 = arith.constant 7 : index
    %40 = memref.load %arg4[%c0_13, %c7] : memref<4x8xf32, #tpu.memory_space<smem>>
    %41 = vector.extract_strided_slice %3 {offsets = [24, 0], sizes = [8, 256], strides = [1, 1]} : vector<32x256xf32> to vector<8x256xf32>
    %42 = vector.broadcast %40 : f32 to vector<8x256xf32>
    %43 = arith.mulf %42, %41 : vector<8x256xf32>
    %44 = arith.addf %39, %43 : vector<8x256xf32>
    %c0_14 = arith.constant 0 : index
    %45 = memref.load %arg5[%c0_14] : memref<4xf32, #tpu.memory_space<smem>>
    %46 = vector.broadcast %45 : f32 to vector<8x256xf32>
    %47 = arith.addf %44, %46 : vector<8x256xf32>
    %48 = math.tanh %47 : vector<8x256xf32>
    %49 = vector.extract_strided_slice %3 {offsets = [0, 0], sizes = [8, 256], strides = [1, 1]} : vector<32x256xf32> to vector<8x256xf32>
    %50 = arith.mulf %48, %49 : vector<8x256xf32>
    %cst_15 = arith.constant 0.000000e+00 : f32
    %51 = vector.broadcast %cst_15 : f32 to vector<8x256xf32>
    %c1_16 = arith.constant 1 : index
    %c0_17 = arith.constant 0 : index
    %52 = memref.load %arg4[%c1_16, %c0_17] : memref<4x8xf32, #tpu.memory_space<smem>>
    %53 = vector.extract_strided_slice %1 {offsets = [0, 0], sizes = [8, 256], strides = [1, 1]} : vector<32x256xf32> to vector<8x256xf32>
    %54 = vector.broadcast %52 : f32 to vector<8x256xf32>
    %55 = arith.mulf %54, %53 : vector<8x256xf32>
    %56 = arith.addf %51, %55 : vector<8x256xf32>
    %c1_18 = arith.constant 1 : index
    %c1_19 = arith.constant 1 : index
    %57 = memref.load %arg4[%c1_18, %c1_19] : memref<4x8xf32, #tpu.memory_space<smem>>
    %58 = vector.extract_strided_slice %1 {offsets = [8, 0], sizes = [8, 256], strides = [1, 1]} : vector<32x256xf32> to vector<8x256xf32>
    %59 = vector.broadcast %57 : f32 to vector<8x256xf32>
    %60 = arith.mulf %59, %58 : vector<8x256xf32>
    %61 = arith.addf %56, %60 : vector<8x256xf32>
    %c1_20 = arith.constant 1 : index
    %c2_21 = arith.constant 2 : index
    %62 = memref.load %arg4[%c1_20, %c2_21] : memref<4x8xf32, #tpu.memory_space<smem>>
    %63 = vector.extract_strided_slice %1 {offsets = [16, 0], sizes = [8, 256], strides = [1, 1]} : vector<32x256xf32> to vector<8x256xf32>
    %64 = vector.broadcast %62 : f32 to vector<8x256xf32>
    %65 = arith.mulf %64, %63 : vector<8x256xf32>
    %66 = arith.addf %61, %65 : vector<8x256xf32>
    %c1_22 = arith.constant 1 : index
    %c3_23 = arith.constant 3 : index
    %67 = memref.load %arg4[%c1_22, %c3_23] : memref<4x8xf32, #tpu.memory_space<smem>>
    %68 = vector.extract_strided_slice %1 {offsets = [24, 0], sizes = [8, 256], strides = [1, 1]} : vector<32x256xf32> to vector<8x256xf32>
    %69 = vector.broadcast %67 : f32 to vector<8x256xf32>
    %70 = arith.mulf %69, %68 : vector<8x256xf32>
    %71 = arith.addf %66, %70 : vector<8x256xf32>
    %c1_24 = arith.constant 1 : index
    %c4_25 = arith.constant 4 : index
    %72 = memref.load %arg4[%c1_24, %c4_25] : memref<4x8xf32, #tpu.memory_space<smem>>
    %73 = vector.extract_strided_slice %3 {offsets = [0, 0], sizes = [8, 256], strides = [1, 1]} : vector<32x256xf32> to vector<8x256xf32>
    %74 = vector.broadcast %72 : f32 to vector<8x256xf32>
    %75 = arith.mulf %74, %73 : vector<8x256xf32>
    %76 = arith.addf %71, %75 : vector<8x256xf32>
    %c1_26 = arith.constant 1 : index
    %c5_27 = arith.constant 5 : index
    %77 = memref.load %arg4[%c1_26, %c5_27] : memref<4x8xf32, #tpu.memory_space<smem>>
    %78 = vector.extract_strided_slice %3 {offsets = [8, 0], sizes = [8, 256], strides = [1, 1]} : vector<32x256xf32> to vector<8x256xf32>
    %79 = vector.broadcast %77 : f32 to vector<8x256xf32>
    %80 = arith.mulf %79, %78 : vector<8x256xf32>
    %81 = arith.addf %76, %80 : vector<8x256xf32>
    %c1_28 = arith.constant 1 : index
    %c6_29 = arith.constant 6 : index
    %82 = memref.load %arg4[%c1_28, %c6_29] : memref<4x8xf32, #tpu.memory_space<smem>>
    %83 = vector.extract_strided_slice %3 {offsets = [16, 0], sizes = [8, 256], strides = [1, 1]} : vector<32x256xf32> to vector<8x256xf32>
    %84 = vector.broadcast %82 : f32 to vector<8x256xf32>
    %85 = arith.mulf %84, %83 : vector<8x256xf32>
    %86 = arith.addf %81, %85 : vector<8x256xf32>
    %c1_30 = arith.constant 1 : index
    %c7_31 = arith.constant 7 : index
    %87 = memref.load %arg4[%c1_30, %c7_31] : memref<4x8xf32, #tpu.memory_space<smem>>
    %88 = vector.extract_strided_slice %3 {offsets = [24, 0], sizes = [8, 256], strides = [1, 1]} : vector<32x256xf32> to vector<8x256xf32>
    %89 = vector.broadcast %87 : f32 to vector<8x256xf32>
    %90 = arith.mulf %89, %88 : vector<8x256xf32>
    %91 = arith.addf %86, %90 : vector<8x256xf32>
    %c1_32 = arith.constant 1 : index
    %92 = memref.load %arg5[%c1_32] : memref<4xf32, #tpu.memory_space<smem>>
    %93 = vector.broadcast %92 : f32 to vector<8x256xf32>
    %94 = arith.addf %91, %93 : vector<8x256xf32>
    %95 = math.tanh %94 : vector<8x256xf32>
    %96 = vector.extract_strided_slice %3 {offsets = [8, 0], sizes = [8, 256], strides = [1, 1]} : vector<32x256xf32> to vector<8x256xf32>
    %97 = arith.mulf %95, %96 : vector<8x256xf32>
    %cst_33 = arith.constant 0.000000e+00 : f32
    %98 = vector.broadcast %cst_33 : f32 to vector<8x256xf32>
    %c2_34 = arith.constant 2 : index
    %c0_35 = arith.constant 0 : index
    %99 = memref.load %arg4[%c2_34, %c0_35] : memref<4x8xf32, #tpu.memory_space<smem>>
    %100 = vector.extract_strided_slice %1 {offsets = [0, 0], sizes = [8, 256], strides = [1, 1]} : vector<32x256xf32> to vector<8x256xf32>
    %101 = vector.broadcast %99 : f32 to vector<8x256xf32>
    %102 = arith.mulf %101, %100 : vector<8x256xf32>
    %103 = arith.addf %98, %102 : vector<8x256xf32>
    %c2_36 = arith.constant 2 : index
    %c1_37 = arith.constant 1 : index
    %104 = memref.load %arg4[%c2_36, %c1_37] : memref<4x8xf32, #tpu.memory_space<smem>>
    %105 = vector.extract_strided_slice %1 {offsets = [8, 0], sizes = [8, 256], strides = [1, 1]} : vector<32x256xf32> to vector<8x256xf32>
    %106 = vector.broadcast %104 : f32 to vector<8x256xf32>
    %107 = arith.mulf %106, %105 : vector<8x256xf32>
    %108 = arith.addf %103, %107 : vector<8x256xf32>
    %c2_38 = arith.constant 2 : index
    %c2_39 = arith.constant 2 : index
    %109 = memref.load %arg4[%c2_38, %c2_39] : memref<4x8xf32, #tpu.memory_space<smem>>
    %110 = vector.extract_strided_slice %1 {offsets = [16, 0], sizes = [8, 256], strides = [1, 1]} : vector<32x256xf32> to vector<8x256xf32>
    %111 = vector.broadcast %109 : f32 to vector<8x256xf32>
    %112 = arith.mulf %111, %110 : vector<8x256xf32>
    %113 = arith.addf %108, %112 : vector<8x256xf32>
    %c2_40 = arith.constant 2 : index
    %c3_41 = arith.constant 3 : index
    %114 = memref.load %arg4[%c2_40, %c3_41] : memref<4x8xf32, #tpu.memory_space<smem>>
    %115 = vector.extract_strided_slice %1 {offsets = [24, 0], sizes = [8, 256], strides = [1, 1]} : vector<32x256xf32> to vector<8x256xf32>
    %116 = vector.broadcast %114 : f32 to vector<8x256xf32>
    %117 = arith.mulf %116, %115 : vector<8x256xf32>
    %118 = arith.addf %113, %117 : vector<8x256xf32>
    %c2_42 = arith.constant 2 : index
    %c4_43 = arith.constant 4 : index
    %119 = memref.load %arg4[%c2_42, %c4_43] : memref<4x8xf32, #tpu.memory_space<smem>>
    %120 = vector.extract_strided_slice %3 {offsets = [0, 0], sizes = [8, 256], strides = [1, 1]} : vector<32x256xf32> to vector<8x256xf32>
    %121 = vector.broadcast %119 : f32 to vector<8x256xf32>
    %122 = arith.mulf %121, %120 : vector<8x256xf32>
    %123 = arith.addf %118, %122 : vector<8x256xf32>
    %c2_44 = arith.constant 2 : index
    %c5_45 = arith.constant 5 : index
    %124 = memref.load %arg4[%c2_44, %c5_45] : memref<4x8xf32, #tpu.memory_space<smem>>
    %125 = vector.extract_strided_slice %3 {offsets = [8, 0], sizes = [8, 256], strides = [1, 1]} : vector<32x256xf32> to vector<8x256xf32>
    %126 = vector.broadcast %124 : f32 to vector<8x256xf32>
    %127 = arith.mulf %126, %125 : vector<8x256xf32>
    %128 = arith.addf %123, %127 : vector<8x256xf32>
    %c2_46 = arith.constant 2 : index
    %c6_47 = arith.constant 6 : index
    %129 = memref.load %arg4[%c2_46, %c6_47] : memref<4x8xf32, #tpu.memory_space<smem>>
    %130 = vector.extract_strided_slice %3 {offsets = [16, 0], sizes = [8, 256], strides = [1, 1]} : vector<32x256xf32> to vector<8x256xf32>
    %131 = vector.broadcast %129 : f32 to vector<8x256xf32>
    %132 = arith.mulf %131, %130 : vector<8x256xf32>
    %133 = arith.addf %128, %132 : vector<8x256xf32>
    %c2_48 = arith.constant 2 : index
    %c7_49 = arith.constant 7 : index
    %134 = memref.load %arg4[%c2_48, %c7_49] : memref<4x8xf32, #tpu.memory_space<smem>>
    %135 = vector.extract_strided_slice %3 {offsets = [24, 0], sizes = [8, 256], strides = [1, 1]} : vector<32x256xf32> to vector<8x256xf32>
    %136 = vector.broadcast %134 : f32 to vector<8x256xf32>
    %137 = arith.mulf %136, %135 : vector<8x256xf32>
    %138 = arith.addf %133, %137 : vector<8x256xf32>
    %c2_50 = arith.constant 2 : index
    %139 = memref.load %arg5[%c2_50] : memref<4xf32, #tpu.memory_space<smem>>
    %140 = vector.broadcast %139 : f32 to vector<8x256xf32>
    %141 = arith.addf %138, %140 : vector<8x256xf32>
    %142 = math.tanh %141 : vector<8x256xf32>
    %143 = vector.extract_strided_slice %3 {offsets = [16, 0], sizes = [8, 256], strides = [1, 1]} : vector<32x256xf32> to vector<8x256xf32>
    %144 = arith.mulf %142, %143 : vector<8x256xf32>
    %cst_51 = arith.constant 0.000000e+00 : f32
    %145 = vector.broadcast %cst_51 : f32 to vector<8x256xf32>
    %c3_52 = arith.constant 3 : index
    %c0_53 = arith.constant 0 : index
    %146 = memref.load %arg4[%c3_52, %c0_53] : memref<4x8xf32, #tpu.memory_space<smem>>
    %147 = vector.extract_strided_slice %1 {offsets = [0, 0], sizes = [8, 256], strides = [1, 1]} : vector<32x256xf32> to vector<8x256xf32>
    %148 = vector.broadcast %146 : f32 to vector<8x256xf32>
    %149 = arith.mulf %148, %147 : vector<8x256xf32>
    %150 = arith.addf %145, %149 : vector<8x256xf32>
    %c3_54 = arith.constant 3 : index
    %c1_55 = arith.constant 1 : index
    %151 = memref.load %arg4[%c3_54, %c1_55] : memref<4x8xf32, #tpu.memory_space<smem>>
    %152 = vector.extract_strided_slice %1 {offsets = [8, 0], sizes = [8, 256], strides = [1, 1]} : vector<32x256xf32> to vector<8x256xf32>
    %153 = vector.broadcast %151 : f32 to vector<8x256xf32>
    %154 = arith.mulf %153, %152 : vector<8x256xf32>
    %155 = arith.addf %150, %154 : vector<8x256xf32>
    %c3_56 = arith.constant 3 : index
    %c2_57 = arith.constant 2 : index
    %156 = memref.load %arg4[%c3_56, %c2_57] : memref<4x8xf32, #tpu.memory_space<smem>>
    %157 = vector.extract_strided_slice %1 {offsets = [16, 0], sizes = [8, 256], strides = [1, 1]} : vector<32x256xf32> to vector<8x256xf32>
    %158 = vector.broadcast %156 : f32 to vector<8x256xf32>
    %159 = arith.mulf %158, %157 : vector<8x256xf32>
    %160 = arith.addf %155, %159 : vector<8x256xf32>
    %c3_58 = arith.constant 3 : index
    %c3_59 = arith.constant 3 : index
    %161 = memref.load %arg4[%c3_58, %c3_59] : memref<4x8xf32, #tpu.memory_space<smem>>
    %162 = vector.extract_strided_slice %1 {offsets = [24, 0], sizes = [8, 256], strides = [1, 1]} : vector<32x256xf32> to vector<8x256xf32>
    %163 = vector.broadcast %161 : f32 to vector<8x256xf32>
    %164 = arith.mulf %163, %162 : vector<8x256xf32>
    %165 = arith.addf %160, %164 : vector<8x256xf32>
    %c3_60 = arith.constant 3 : index
    %c4_61 = arith.constant 4 : index
    %166 = memref.load %arg4[%c3_60, %c4_61] : memref<4x8xf32, #tpu.memory_space<smem>>
    %167 = vector.extract_strided_slice %3 {offsets = [0, 0], sizes = [8, 256], strides = [1, 1]} : vector<32x256xf32> to vector<8x256xf32>
    %168 = vector.broadcast %166 : f32 to vector<8x256xf32>
    %169 = arith.mulf %168, %167 : vector<8x256xf32>
    %170 = arith.addf %165, %169 : vector<8x256xf32>
    %c3_62 = arith.constant 3 : index
    %c5_63 = arith.constant 5 : index
    %171 = memref.load %arg4[%c3_62, %c5_63] : memref<4x8xf32, #tpu.memory_space<smem>>
    %172 = vector.extract_strided_slice %3 {offsets = [8, 0], sizes = [8, 256], strides = [1, 1]} : vector<32x256xf32> to vector<8x256xf32>
    %173 = vector.broadcast %171 : f32 to vector<8x256xf32>
    %174 = arith.mulf %173, %172 : vector<8x256xf32>
    %175 = arith.addf %170, %174 : vector<8x256xf32>
    %c3_64 = arith.constant 3 : index
    %c6_65 = arith.constant 6 : index
    %176 = memref.load %arg4[%c3_64, %c6_65] : memref<4x8xf32, #tpu.memory_space<smem>>
    %177 = vector.extract_strided_slice %3 {offsets = [16, 0], sizes = [8, 256], strides = [1, 1]} : vector<32x256xf32> to vector<8x256xf32>
    %178 = vector.broadcast %176 : f32 to vector<8x256xf32>
    %179 = arith.mulf %178, %177 : vector<8x256xf32>
    %180 = arith.addf %175, %179 : vector<8x256xf32>
    %c3_66 = arith.constant 3 : index
    %c7_67 = arith.constant 7 : index
    %181 = memref.load %arg4[%c3_66, %c7_67] : memref<4x8xf32, #tpu.memory_space<smem>>
    %182 = vector.extract_strided_slice %3 {offsets = [24, 0], sizes = [8, 256], strides = [1, 1]} : vector<32x256xf32> to vector<8x256xf32>
    %183 = vector.broadcast %181 : f32 to vector<8x256xf32>
    %184 = arith.mulf %183, %182 : vector<8x256xf32>
    %185 = arith.addf %180, %184 : vector<8x256xf32>
    %c3_68 = arith.constant 3 : index
    %186 = memref.load %arg5[%c3_68] : memref<4xf32, #tpu.memory_space<smem>>
    %187 = vector.broadcast %186 : f32 to vector<8x256xf32>
    %188 = arith.addf %185, %187 : vector<8x256xf32>
    %189 = math.tanh %188 : vector<8x256xf32>
    %190 = vector.extract_strided_slice %3 {offsets = [24, 0], sizes = [8, 256], strides = [1, 1]} : vector<32x256xf32> to vector<8x256xf32>
    %191 = arith.mulf %189, %190 : vector<8x256xf32>
    %cst_69 = arith.constant 0.000000e+00 : f32
    %192 = vector.broadcast %cst_69 : f32 to vector<8x256xf32>
    %c0_70 = arith.constant 0 : index
    %c0_71 = arith.constant 0 : index
    %193 = memref.load %arg6[%c0_70, %c0_71] : memref<4x4xf32, #tpu.memory_space<smem>>
    %194 = vector.broadcast %193 : f32 to vector<8x256xf32>
    %195 = arith.mulf %194, %50 : vector<8x256xf32>
    %196 = arith.addf %192, %195 : vector<8x256xf32>
    %c0_72 = arith.constant 0 : index
    %c1_73 = arith.constant 1 : index
    %197 = memref.load %arg6[%c0_72, %c1_73] : memref<4x4xf32, #tpu.memory_space<smem>>
    %198 = vector.broadcast %197 : f32 to vector<8x256xf32>
    %199 = arith.mulf %198, %97 : vector<8x256xf32>
    %200 = arith.addf %196, %199 : vector<8x256xf32>
    %c0_74 = arith.constant 0 : index
    %c2_75 = arith.constant 2 : index
    %201 = memref.load %arg6[%c0_74, %c2_75] : memref<4x4xf32, #tpu.memory_space<smem>>
    %202 = vector.broadcast %201 : f32 to vector<8x256xf32>
    %203 = arith.mulf %202, %144 : vector<8x256xf32>
    %204 = arith.addf %200, %203 : vector<8x256xf32>
    %c0_76 = arith.constant 0 : index
    %c3_77 = arith.constant 3 : index
    %205 = memref.load %arg6[%c0_76, %c3_77] : memref<4x4xf32, #tpu.memory_space<smem>>
    %206 = vector.broadcast %205 : f32 to vector<8x256xf32>
    %207 = arith.mulf %206, %191 : vector<8x256xf32>
    %208 = arith.addf %204, %207 : vector<8x256xf32>
    %c0_78 = arith.constant 0 : index
    %209 = memref.load %arg7[%c0_78] : memref<4xf32, #tpu.memory_space<smem>>
    %210 = vector.broadcast %209 : f32 to vector<8x256xf32>
    %211 = arith.addf %208, %210 : vector<8x256xf32>
    %cst_79 = arith.constant 0.000000e+00 : f32
    %212 = vector.broadcast %cst_79 : f32 to vector<8x256xf32>
    %213 = arith.maximumf %211, %212 : vector<8x256xf32>
    %c0_80 = arith.constant 0 : index
    %214 = memref.load %arg8[%c0_80] : memref<4xf32, #tpu.memory_space<smem>>
    %cst_81 = arith.constant 0.000000e+00 : f32
    %215 = vector.broadcast %cst_81 : f32 to vector<8x256xf32>
    %216 = arith.minimumf %211, %215 : vector<8x256xf32>
    %217 = vector.broadcast %214 : f32 to vector<8x256xf32>
    %218 = arith.mulf %217, %216 : vector<8x256xf32>
    %219 = arith.addf %213, %218 : vector<8x256xf32>
    %cst_82 = arith.constant 0.000000e+00 : f32
    %220 = vector.broadcast %cst_82 : f32 to vector<8x256xf32>
    %c1_83 = arith.constant 1 : index
    %c0_84 = arith.constant 0 : index
    %221 = memref.load %arg6[%c1_83, %c0_84] : memref<4x4xf32, #tpu.memory_space<smem>>
    %222 = vector.broadcast %221 : f32 to vector<8x256xf32>
    %223 = arith.mulf %222, %50 : vector<8x256xf32>
    %224 = arith.addf %220, %223 : vector<8x256xf32>
    %c1_85 = arith.constant 1 : index
    %c1_86 = arith.constant 1 : index
    %225 = memref.load %arg6[%c1_85, %c1_86] : memref<4x4xf32, #tpu.memory_space<smem>>
    %226 = vector.broadcast %225 : f32 to vector<8x256xf32>
    %227 = arith.mulf %226, %97 : vector<8x256xf32>
    %228 = arith.addf %224, %227 : vector<8x256xf32>
    %c1_87 = arith.constant 1 : index
    %c2_88 = arith.constant 2 : index
    %229 = memref.load %arg6[%c1_87, %c2_88] : memref<4x4xf32, #tpu.memory_space<smem>>
    %230 = vector.broadcast %229 : f32 to vector<8x256xf32>
    %231 = arith.mulf %230, %144 : vector<8x256xf32>
    %232 = arith.addf %228, %231 : vector<8x256xf32>
    %c1_89 = arith.constant 1 : index
    %c3_90 = arith.constant 3 : index
    %233 = memref.load %arg6[%c1_89, %c3_90] : memref<4x4xf32, #tpu.memory_space<smem>>
    %234 = vector.broadcast %233 : f32 to vector<8x256xf32>
    %235 = arith.mulf %234, %191 : vector<8x256xf32>
    %236 = arith.addf %232, %235 : vector<8x256xf32>
    %c1_91 = arith.constant 1 : index
    %237 = memref.load %arg7[%c1_91] : memref<4xf32, #tpu.memory_space<smem>>
    %238 = vector.broadcast %237 : f32 to vector<8x256xf32>
    %239 = arith.addf %236, %238 : vector<8x256xf32>
    %cst_92 = arith.constant 0.000000e+00 : f32
    %240 = vector.broadcast %cst_92 : f32 to vector<8x256xf32>
    %241 = arith.maximumf %239, %240 : vector<8x256xf32>
    %c1_93 = arith.constant 1 : index
    %242 = memref.load %arg8[%c1_93] : memref<4xf32, #tpu.memory_space<smem>>
    %cst_94 = arith.constant 0.000000e+00 : f32
    %243 = vector.broadcast %cst_94 : f32 to vector<8x256xf32>
    %244 = arith.minimumf %239, %243 : vector<8x256xf32>
    %245 = vector.broadcast %242 : f32 to vector<8x256xf32>
    %246 = arith.mulf %245, %244 : vector<8x256xf32>
    %247 = arith.addf %241, %246 : vector<8x256xf32>
    %cst_95 = arith.constant 0.000000e+00 : f32
    %248 = vector.broadcast %cst_95 : f32 to vector<8x256xf32>
    %c2_96 = arith.constant 2 : index
    %c0_97 = arith.constant 0 : index
    %249 = memref.load %arg6[%c2_96, %c0_97] : memref<4x4xf32, #tpu.memory_space<smem>>
    %250 = vector.broadcast %249 : f32 to vector<8x256xf32>
    %251 = arith.mulf %250, %50 : vector<8x256xf32>
    %252 = arith.addf %248, %251 : vector<8x256xf32>
    %c2_98 = arith.constant 2 : index
    %c1_99 = arith.constant 1 : index
    %253 = memref.load %arg6[%c2_98, %c1_99] : memref<4x4xf32, #tpu.memory_space<smem>>
    %254 = vector.broadcast %253 : f32 to vector<8x256xf32>
    %255 = arith.mulf %254, %97 : vector<8x256xf32>
    %256 = arith.addf %252, %255 : vector<8x256xf32>
    %c2_100 = arith.constant 2 : index
    %c2_101 = arith.constant 2 : index
    %257 = memref.load %arg6[%c2_100, %c2_101] : memref<4x4xf32, #tpu.memory_space<smem>>
    %258 = vector.broadcast %257 : f32 to vector<8x256xf32>
    %259 = arith.mulf %258, %144 : vector<8x256xf32>
    %260 = arith.addf %256, %259 : vector<8x256xf32>
    %c2_102 = arith.constant 2 : index
    %c3_103 = arith.constant 3 : index
    %261 = memref.load %arg6[%c2_102, %c3_103] : memref<4x4xf32, #tpu.memory_space<smem>>
    %262 = vector.broadcast %261 : f32 to vector<8x256xf32>
    %263 = arith.mulf %262, %191 : vector<8x256xf32>
    %264 = arith.addf %260, %263 : vector<8x256xf32>
    %c2_104 = arith.constant 2 : index
    %265 = memref.load %arg7[%c2_104] : memref<4xf32, #tpu.memory_space<smem>>
    %266 = vector.broadcast %265 : f32 to vector<8x256xf32>
    %267 = arith.addf %264, %266 : vector<8x256xf32>
    %cst_105 = arith.constant 0.000000e+00 : f32
    %268 = vector.broadcast %cst_105 : f32 to vector<8x256xf32>
    %269 = arith.maximumf %267, %268 : vector<8x256xf32>
    %c2_106 = arith.constant 2 : index
    %270 = memref.load %arg8[%c2_106] : memref<4xf32, #tpu.memory_space<smem>>
    %cst_107 = arith.constant 0.000000e+00 : f32
    %271 = vector.broadcast %cst_107 : f32 to vector<8x256xf32>
    %272 = arith.minimumf %267, %271 : vector<8x256xf32>
    %273 = vector.broadcast %270 : f32 to vector<8x256xf32>
    %274 = arith.mulf %273, %272 : vector<8x256xf32>
    %275 = arith.addf %269, %274 : vector<8x256xf32>
    %cst_108 = arith.constant 0.000000e+00 : f32
    %276 = vector.broadcast %cst_108 : f32 to vector<8x256xf32>
    %c3_109 = arith.constant 3 : index
    %c0_110 = arith.constant 0 : index
    %277 = memref.load %arg6[%c3_109, %c0_110] : memref<4x4xf32, #tpu.memory_space<smem>>
    %278 = vector.broadcast %277 : f32 to vector<8x256xf32>
    %279 = arith.mulf %278, %50 : vector<8x256xf32>
    %280 = arith.addf %276, %279 : vector<8x256xf32>
    %c3_111 = arith.constant 3 : index
    %c1_112 = arith.constant 1 : index
    %281 = memref.load %arg6[%c3_111, %c1_112] : memref<4x4xf32, #tpu.memory_space<smem>>
    %282 = vector.broadcast %281 : f32 to vector<8x256xf32>
    %283 = arith.mulf %282, %97 : vector<8x256xf32>
    %284 = arith.addf %280, %283 : vector<8x256xf32>
    %c3_113 = arith.constant 3 : index
    %c2_114 = arith.constant 2 : index
    %285 = memref.load %arg6[%c3_113, %c2_114] : memref<4x4xf32, #tpu.memory_space<smem>>
    %286 = vector.broadcast %285 : f32 to vector<8x256xf32>
    %287 = arith.mulf %286, %144 : vector<8x256xf32>
    %288 = arith.addf %284, %287 : vector<8x256xf32>
    %c3_115 = arith.constant 3 : index
    %c3_116 = arith.constant 3 : index
    %289 = memref.load %arg6[%c3_115, %c3_116] : memref<4x4xf32, #tpu.memory_space<smem>>
    %290 = vector.broadcast %289 : f32 to vector<8x256xf32>
    %291 = arith.mulf %290, %191 : vector<8x256xf32>
    %292 = arith.addf %288, %291 : vector<8x256xf32>
    %c3_117 = arith.constant 3 : index
    %293 = memref.load %arg7[%c3_117] : memref<4xf32, #tpu.memory_space<smem>>
    %294 = vector.broadcast %293 : f32 to vector<8x256xf32>
    %295 = arith.addf %292, %294 : vector<8x256xf32>
    %cst_118 = arith.constant 0.000000e+00 : f32
    %296 = vector.broadcast %cst_118 : f32 to vector<8x256xf32>
    %297 = arith.maximumf %295, %296 : vector<8x256xf32>
    %c3_119 = arith.constant 3 : index
    %298 = memref.load %arg8[%c3_119] : memref<4xf32, #tpu.memory_space<smem>>
    %cst_120 = arith.constant 0.000000e+00 : f32
    %299 = vector.broadcast %cst_120 : f32 to vector<8x256xf32>
    %300 = arith.minimumf %295, %299 : vector<8x256xf32>
    %301 = vector.broadcast %298 : f32 to vector<8x256xf32>
    %302 = arith.mulf %301, %300 : vector<8x256xf32>
    %303 = arith.addf %297, %302 : vector<8x256xf32>
    %304 = tpu.concatenate %219, %247, %275, %303 in 0 : vector<8x256xf32>, vector<8x256xf32>, vector<8x256xf32>, vector<8x256xf32> -> vector<32x256xf32>
    %c0_121 = arith.constant 0 : index
    %c0_122 = arith.constant 0 : index
    %305 = vector.load %arg9[%c0_121, %c0_122] : memref<128x32xf32, #tpu.memory_space<vmem>>, vector<128x32xf32>
    %cst_123 = arith.constant dense<0.000000e+00> : vector<128x256xf32>
    %306 = tpu.matmul %305, %304, %cst_123 {dimension_numbers = #tpu.dot_dimension_numbers<[1], [0], [0], [1], [0, 0, 1, 1], [], []>} : vector<128x32xf32>, vector<32x256xf32>, vector<128x256xf32> -> vector<128x256xf32>
    %c0_124 = arith.constant 0 : index
    %c0_125 = arith.constant 0 : index
    %307 = vector.load %arg10[%c0_124, %c0_125] : memref<128x1xf32, #tpu.memory_space<vmem>>, vector<128x1xf32>
    %308 = vector.broadcast %307 : vector<128x1xf32> to vector<128x256xf32>
    %309 = arith.addf %306, %308 : vector<128x256xf32>
    %cst_126 = arith.constant 0.000000e+00 : f32
    %310 = vector.broadcast %cst_126 : f32 to vector<128x256xf32>
    %311 = arith.maximumf %309, %310 : vector<128x256xf32>
    %c0_127 = arith.constant 0 : index
    %c0_128 = arith.constant 0 : index
    %312 = vector.load %arg11[%c0_127, %c0_128] : memref<128x1xf32, #tpu.memory_space<vmem>>, vector<128x1xf32>
    %cst_129 = arith.constant 0.000000e+00 : f32
    %313 = vector.broadcast %cst_129 : f32 to vector<128x256xf32>
    %314 = arith.minimumf %309, %313 : vector<128x256xf32>
    %315 = vector.broadcast %312 : vector<128x1xf32> to vector<128x256xf32>
    %316 = arith.mulf %315, %314 : vector<128x256xf32>
    %317 = arith.addf %311, %316 : vector<128x256xf32>
    %c0_130 = arith.constant 0 : index
    %c0_131 = arith.constant 0 : index
    %c0_132 = arith.constant 0 : index
    %318 = vector.load %arg12[%c0_130, %c0_131, %c0_132] : memref<1x128x256xf32, #tpu.memory_space<vmem>>, vector<1x128x256xf32>
    %319 = vector.shape_cast %318 : vector<1x128x256xf32> to vector<128x256xf32>
    %320 = vector.shape_cast %317 : vector<128x256xf32> to vector<1x128x256xf32>
    tpu.vector_store %arg12[%c0_130, %c0_131, %c0_132], %320 {strides = array<i32>} : memref<1x128x256xf32, #tpu.memory_space<vmem>>, vector<1x128x256xf32>,
    return
  }
  func.func @transform_0(%arg0: i32, %arg1: i32) -> (i32, i32, i32) {
    %c0_i32 = arith.constant 0 : i32
    %c0_i32_0 = arith.constant 0 : i32
    return %arg0, %c0_i32, %arg1 : i32, i32, i32
  }
  func.func @transform_1(%arg0: i32, %arg1: i32) -> (i32, i32, i32) {
    %c0_i32 = arith.constant 0 : i32
    %c0_i32_0 = arith.constant 0 : i32
    return %arg0, %c0_i32, %arg1 : i32, i32, i32
  }
  func.func @transform_2(%arg0: i32, %arg1: i32) -> (i32, i32) {
    %c0_i32 = arith.constant 0 : i32
    %c0_i32_0 = arith.constant 0 : i32
    %c0_i32_1 = arith.constant 0 : i32
    return %c0_i32, %c0_i32_0 : i32, i32
  }
  func.func @transform_3(%arg0: i32, %arg1: i32) -> i32 {
    %c0_i32 = arith.constant 0 : i32
    %c0_i32_0 = arith.constant 0 : i32
    return %c0_i32 : i32
  }
  func.func @transform_4(%arg0: i32, %arg1: i32) -> (i32, i32) {
    %c0_i32 = arith.constant 0 : i32
    %c0_i32_0 = arith.constant 0 : i32
    %c0_i32_1 = arith.constant 0 : i32
    return %c0_i32, %c0_i32_0 : i32, i32
  }
  func.func @transform_5(%arg0: i32, %arg1: i32) -> i32 {
    %c0_i32 = arith.constant 0 : i32
    %c0_i32_0 = arith.constant 0 : i32
    return %c0_i32 : i32
  }
  func.func @transform_6(%arg0: i32, %arg1: i32) -> i32 {
    %c0_i32 = arith.constant 0 : i32
    %c0_i32_0 = arith.constant 0 : i32
    return %c0_i32 : i32
  }
  func.func @transform_7(%arg0: i32, %arg1: i32) -> (i32, i32) {
    %c0_i32 = arith.constant 0 : i32
    %c0_i32_0 = arith.constant 0 : i32
    %c0_i32_1 = arith.constant 0 : i32
    return %c0_i32, %c0_i32_0 : i32, i32
  }
  func.func @transform_8(%arg0: i32, %arg1: i32) -> (i32, i32) {
    %c0_i32 = arith.constant 0 : i32
    %c0_i32_0 = arith.constant 0 : i32
    %c0_i32_1 = arith.constant 0 : i32
    return %c0_i32, %c0_i32_0 : i32, i32
  }
  func.func @transform_9(%arg0: i32, %arg1: i32) -> (i32, i32) {
    %c0_i32 = arith.constant 0 : i32
    %c0_i32_0 = arith.constant 0 : i32
    %c0_i32_1 = arith.constant 0 : i32
    return %c0_i32, %c0_i32_0 : i32, i32
  }
  func.func @transform_10(%arg0: i32, %arg1: i32) -> (i32, i32, i32) {
    %c0_i32 = arith.constant 0 : i32
    %c0_i32_0 = arith.constant 0 : i32
    return %arg0, %c0_i32, %arg1 : i32, i32, i32
  }
}

</mosaic_0001>

<llo_original>
// kernel: tpu_custom_call.1
$region0: #{tpu_custom_call.1}
  #allocation0 [shape = 'u32[]', space=smem, size = 0x4, offset = 0x4, fixed_abs, tag = 'smem constant byte address 0x4 - core index']
  #allocation1 [shape = 'u32[72,128]{1,0:T(1,128)}', space=vmem, size = 0x9000, scoped, tag = 'internal scratch']
  %s0 = inlined_call_operand.vmem [shape: f32[2,32,256], index: 0, kind: input, shape index: {}]
  %s1 = inlined_call_operand.vmem [shape: f32[2,32,256], index: 1, kind: input, shape index: {}]
  %s2 = inlined_call_operand.vmem [shape: f32[4,8], index: 2, kind: input, shape index: {}]
  %s3 = inlined_call_operand.vmem [shape: f32[4], index: 3, kind: input, shape index: {}]
  %s4 = inlined_call_operand.vmem [shape: f32[4,4], index: 4, kind: input, shape index: {}]
  %s5 = inlined_call_operand.vmem [shape: f32[4], index: 5, kind: input, shape index: {}]
  %s6 = inlined_call_operand.vmem [shape: f32[4], index: 6, kind: input, shape index: {}]
  %s7 = inlined_call_operand.vmem [shape: f32[128,32], index: 7, kind: input, shape index: {}]
  %s8 = inlined_call_operand.vmem [shape: f32[128,1], index: 8, kind: input, shape index: {}]
  %s9 = inlined_call_operand.vmem [shape: f32[128,1], index: 9, kind: input, shape index: {}]
  %s10 = inlined_call_operand.hbm [shape: f32[2,128,256], index: 10, kind: output, shape index: {}]
  %s11 = sld [smem:[#allocation0]]
  $region93: #{tpu_custom_call.1} parent=0
    _
  %s13 = ssub.s32 1, %s11
  %s14 = scalar_select 0, %s13, %s11
  $region1: #{tpu_custom_call.1} parent=0
    #allocation2 [shape = 'u8[2048]{0}', space=smem, size = 0x800, scoped, tag = 'input window, operand 2, single buffered']
    #allocation3 [shape = 's32[2]{0}', space=sflag, size = 0x8, scoped, tag = 'scoped memory for tpu_custom_call.1']
    #allocation4 [shape = 's32[2]{0}', space=sflag, size = 0x8, scoped, tag = 'scoped memory for tpu_custom_call.1']
    #allocation5 [shape = 'u8[512]{0}', space=smem, size = 0x200, scoped, tag = 'input window, operand 3, single buffered']
    #allocation6 [shape = 's32[1]{0}', space=sflag, size = 0x4, scoped, tag = 'scoped memory for tpu_custom_call.1']
    #allocation7 [shape = 'u8[2048]{0}', space=smem, size = 0x800, scoped, tag = 'input window, operand 4, single buffered']
    #allocation8 [shape = 'u8[512]{0}', space=smem, size = 0x200, scoped, tag = 'input window, operand 5, single buffered']
    #allocation9 [shape = 's32[1]{0}', space=sflag, size = 0x4, scoped, tag = 'scoped memory for tpu_custom_call.1']
    #allocation10 [shape = 'u8[512]{0}', space=smem, size = 0x200, scoped, tag = 'input window, operand 6, single buffered']
    #allocation11 [shape = 'u8[262144]{0}', space=vmem, size = 0x40000, scoped, tag = 'output window, operand 0']
    %15 = vsyncpa [#allocation4], 0
    %16 = vsyncpa [#allocation6], 0
    %17 = vsyncpa [#allocation9], 0
    %18 = vsyncpa [#allocation3], 0
    %s19 = scalar_lea.sflag [#allocation3], 1
    %20 = vsyncpa %s19, 0
    loop: start=0, step=1, limit=4
    $region2: #{tpu_custom_call.1} parent=1 // loop_pre_header
      _
    $region3: #{tpu_custom_call.1} parent=1 // loop_header
      %s22 = sphi 0, %s26
      %p23 = scmp.ge.s32.totalorder %s22, 4
      %s29 = sphi 0, %s41
      %s30 = sphi 0, %s37
      %s31 = sphi 0, %s29
      %s32 = sphi 0, %s30
      %s33 = sphi 0, %s31
      %s34 = sphi 0, %s32
      %s46 = sphi 0, %s48
      %s49 = sphi 0, %s46
      %s50 = sphi 0, %s49
      %s66 = sphi 0, %s50
      %s74 = sphi 0, %s76
      %s77 = sphi 0, %s74
      %s78 = sphi 0, %s77
      %s94 = sphi 0, %s78
      %s98 = sphi 0, %s98
      %s100 = sphi 0, %s98
      %s101 = sphi 0, %s100
      %s115 = sphi 0, %s101
      %s119 = sphi 0, %s119
      %s121 = sphi 0, %s119
      %s122 = sphi 0, %s121
      %s136 = sphi 0, %s122
      %s140 = sphi 0, %s140
      %s142 = sphi 0, %s140
      %s143 = sphi 0, %s142
      %s157 = sphi 0, %s143
      %s161 = sphi 0, %s161
      %s163 = sphi 0, %s161
      %s164 = sphi 0, %s163
      %s178 = sphi 0, %s164
      %s182 = sphi 0, %s182
      %s184 = sphi 0, %s182
      %s185 = sphi 0, %s184
      %s199 = sphi 0, %s185
      %s203 = sphi 0, %s203
      %s205 = sphi 0, %s203
      %s206 = sphi 0, %s205
      %s220 = sphi 0, %s206
      %s224 = sphi 0, %s224
      %s226 = sphi 0, %s224
      %s227 = sphi 0, %s226
      %s241 = sphi 0, %s227
      %s245 = sphi 0, %s245
      %s247 = sphi 0, %s245
      %s248 = sphi 0, %s247
      %s262 = sphi 0, %s248
      %s270 = sphi 0, %s272
      %s273 = sphi 0, %s270
      %s274 = sphi 0, %s273
      %s290 = sphi 0, %s274
    $region4: #{tpu_custom_call.1} parent=1 // loop_header_branch
      %25 = sbr.rel (%p23) target = $region8
    $region5: #{tpu_custom_call.1} parent=1 // loop_body
      %s27 = ssub.s32 %s22, 1
      %s28 = ssub.s32 %s22, 2
      %s35 = sadd.s32 1, %s30
      %p36 = scmp.ge.s32.totalorder %s35, 1
      %s37 = scalar_select %p36, 0, %s35
      %s38 = sadd.s32 1, %s29
      %s39 = scalar_select %p36, %s38, %s29
      %p40 = scmp.ge.s32.totalorder %s39, 2
      %s41 = scalar_select %p40, 0, %s39
      %s42 = ssub.s32 %s29, %s41
      %s43 = ssub.s32 %s30, %s37
      %s44 = sor.u32 %s42, %s43
      %p45 = scmp.eq.s32.totalorder %s44, 0
      %s47 = sadd.s32 %s46, 1
      %s48 = scalar_select %p45, %s46, %s47
      %p51 = pneg %p45
      %p52 = scmp.eq.s32.totalorder %s22, 1
      %p53 = por %p51, %p52
      %p54 = scmp.ne.s32.totalorder %s46, %s49
      %p55 = scmp.eq.s32.totalorder %s22, 0
      %p56 = por %p54, %p55
      %p57 = scmp.ne.s32.totalorder %s46, %s49
      %p58 = scmp.eq.s32.totalorder %s27, 1
      %p59 = por %p57, %p58
      %p60 = scmp.ne.s32.totalorder %s49, %s50
      %p61 = scmp.eq.s32.totalorder %s27, 0
      %p62 = por %p60, %p61
      %p63 = scmp.ne.s32.totalorder %s49, %s50
      %p64 = scmp.eq.s32.totalorder %s28, 1
      %p65 = por %p63, %p64
      %p67 = scmp.ne.s32.totalorder %s50, %s66
      %p68 = scmp.eq.s32.totalorder %s28, 0
      %p69 = por %p67, %p68
      %s70 = ssub.s32 %s29, %s41
      %s71 = ssub.s32 %s30, %s37
      %s72 = sor.u32 %s70, %s71
      %p73 = scmp.eq.s32.totalorder %s72, 0
      %s75 = sadd.s32 %s74, 1
      %s76 = scalar_select %p73, %s74, %s75
      %p79 = pneg %p73
      %p80 = scmp.eq.s32.totalorder %s22, 1
      %p81 = por %p79, %p80
      %p82 = scmp.ne.s32.totalorder %s74, %s77
      %p83 = scmp.eq.s32.totalorder %s22, 0
      %p84 = por %p82, %p83
      %p85 = scmp.ne.s32.totalorder %s74, %s77
      %p86 = scmp.eq.s32.totalorder %s27, 1
      %p87 = por %p85, %p86
      %p88 = scmp.ne.s32.totalorder %s77, %s78
      %p89 = scmp.eq.s32.totalorder %s27, 0
      %p90 = por %p88, %p89
      %p91 = scmp.ne.s32.totalorder %s77, %s78
      %p92 = scmp.eq.s32.totalorder %s28, 1
      %p93 = por %p91, %p92
      %p95 = scmp.ne.s32.totalorder %s78, %s94
      %p96 = scmp.eq.s32.totalorder %s28, 0
      %p97 = por %p95, %p96
      %s99 = sadd.s32 %s98, 1
      %p102 = scmp.eq.s32.totalorder %s22, 1
      %p103 = scmp.ne.s32.totalorder %s98, %s100
      %p104 = scmp.eq.s32.totalorder %s22, 0
      %p105 = por %p103, %p104
      %p106 = scmp.ne.s32.totalorder %s98, %s100
      %p107 = scmp.eq.s32.totalorder %s27, 1
      %p108 = por %p106, %p107
      %p109 = scmp.ne.s32.totalorder %s100, %s101
      %p110 = scmp.eq.s32.totalorder %s27, 0
      %p111 = por %p109, %p110
      %p112 = scmp.ne.s32.totalorder %s100, %s101
      %p113 = scmp.eq.s32.totalorder %s28, 1
      %p114 = por %p112, %p113
      %p116 = scmp.ne.s32.totalorder %s101, %s115
      %p117 = scmp.eq.s32.totalorder %s28, 0
      %p118 = por %p116, %p117
      %s120 = sadd.s32 %s119, 1
      %p123 = scmp.eq.s32.totalorder %s22, 1
      %p124 = scmp.ne.s32.totalorder %s119, %s121
      %p125 = scmp.eq.s32.totalorder %s22, 0
      %p126 = por %p124, %p125
      %p127 = scmp.ne.s32.totalorder %s119, %s121
      %p128 = scmp.eq.s32.totalorder %s27, 1
      %p129 = por %p127, %p128
      %p130 = scmp.ne.s32.totalorder %s121, %s122
      %p131 = scmp.eq.s32.totalorder %s27, 0
      %p132 = por %p130, %p131
      %p133 = scmp.ne.s32.totalorder %s121, %s122
      %p134 = scmp.eq.s32.totalorder %s28, 1
      %p135 = por %p133, %p134
      %p137 = scmp.ne.s32.totalorder %s122, %s136
      %p138 = scmp.eq.s32.totalorder %s28, 0
      %p139 = por %p137, %p138
      %s141 = sadd.s32 %s140, 1
      %p144 = scmp.eq.s32.totalorder %s22, 1
      %p145 = scmp.ne.s32.totalorder %s140, %s142
      %p146 = scmp.eq.s32.totalorder %s22, 0
      %p147 = por %p145, %p146
      %p148 = scmp.ne.s32.totalorder %s140, %s142
      %p149 = scmp.eq.s32.totalorder %s27, 1
      %p150 = por %p148, %p149
      %p151 = scmp.ne.s32.totalorder %s142, %s143
      %p152 = scmp.eq.s32.totalorder %s27, 0
      %p153 = por %p151, %p152
      %p154 = scmp.ne.s32.totalorder %s142, %s143
      %p155 = scmp.eq.s32.totalorder %s28, 1
      %p156 = por %p154, %p155
      %p158 = scmp.ne.s32.totalorder %s143, %s157
      %p159 = scmp.eq.s32.totalorder %s28, 0
      %p160 = por %p158, %p159
      %s162 = sadd.s32 %s161, 1
      %p165 = scmp.eq.s32.totalorder %s22, 1
      %p166 = scmp.ne.s32.totalorder %s161, %s163
      %p167 = scmp.eq.s32.totalorder %s22, 0
      %p168 = por %p166, %p167
      %p169 = scmp.ne.s32.totalorder %s161, %s163
      %p170 = scmp.eq.s32.totalorder %s27, 1
      %p171 = por %p169, %p170
      %p172 = scmp.ne.s32.totalorder %s163, %s164
      %p173 = scmp.eq.s32.totalorder %s27, 0
      %p174 = por %p172, %p173
      %p175 = scmp.ne.s32.totalorder %s163, %s164
      %p176 = scmp.eq.s32.totalorder %s28, 1
      %p177 = por %p175, %p176
      %p179 = scmp.ne.s32.totalorder %s164, %s178
      %p180 = scmp.eq.s32.totalorder %s28, 0
      %p181 = por %p179, %p180
      %s183 = sadd.s32 %s182, 1
      %p186 = scmp.eq.s32.totalorder %s22, 1
      %p187 = scmp.ne.s32.totalorder %s182, %s184
      %p188 = scmp.eq.s32.totalorder %s22, 0
      %p189 = por %p187, %p188
      %p190 = scmp.ne.s32.totalorder %s182, %s184
      %p191 = scmp.eq.s32.totalorder %s27, 1
      %p192 = por %p190, %p191
      %p193 = scmp.ne.s32.totalorder %s184, %s185
      %p194 = scmp.eq.s32.totalorder %s27, 0
      %p195 = por %p193, %p194
      %p196 = scmp.ne.s32.totalorder %s184, %s185
      %p197 = scmp.eq.s32.totalorder %s28, 1
      %p198 = por %p196, %p197
      %p200 = scmp.ne.s32.totalorder %s185, %s199
      %p201 = scmp.eq.s32.totalorder %s28, 0
      %p202 = por %p200, %p201
      %s204 = sadd.s32 %s203, 1
      %p207 = scmp.eq.s32.totalorder %s22, 1
      %p208 = scmp.ne.s32.totalorder %s203, %s205
      %p209 = scmp.eq.s32.totalorder %s22, 0
      %p210 = por %p208, %p209
      %p211 = scmp.ne.s32.totalorder %s203, %s205
      %p212 = scmp.eq.s32.totalorder %s27, 1
      %p213 = por %p211, %p212
      %p214 = scmp.ne.s32.totalorder %s205, %s206
      %p215 = scmp.eq.s32.totalorder %s27, 0
      %p216 = por %p214, %p215
      %p217 = scmp.ne.s32.totalorder %s205, %s206
      %p218 = scmp.eq.s32.totalorder %s28, 1
      %p219 = por %p217, %p218
      %p221 = scmp.ne.s32.totalorder %s206, %s220
      %p222 = scmp.eq.s32.totalorder %s28, 0
      %p223 = por %p221, %p222
      %s225 = sadd.s32 %s224, 1
      %p228 = scmp.eq.s32.totalorder %s22, 1
      %p229 = scmp.ne.s32.totalorder %s224, %s226
      %p230 = scmp.eq.s32.totalorder %s22, 0
      %p231 = por %p229, %p230
      %p232 = scmp.ne.s32.totalorder %s224, %s226
      %p233 = scmp.eq.s32.totalorder %s27, 1
      %p234 = por %p232, %p233
      %p235 = scmp.ne.s32.totalorder %s226, %s227
      %p236 = scmp.eq.s32.totalorder %s27, 0
      %p237 = por %p235, %p236
      %p238 = scmp.ne.s32.totalorder %s226, %s227
      %p239 = scmp.eq.s32.totalorder %s28, 1
      %p240 = por %p238, %p239
      %p242 = scmp.ne.s32.totalorder %s227, %s241
      %p243 = scmp.eq.s32.totalorder %s28, 0
      %p244 = por %p242, %p243
      %s246 = sadd.s32 %s245, 1
      %p249 = scmp.eq.s32.totalorder %s22, 1
      %p250 = scmp.ne.s32.totalorder %s245, %s247
      %p251 = scmp.eq.s32.totalorder %s22, 0
      %p252 = por %p250, %p251
      %p253 = scmp.ne.s32.totalorder %s245, %s247
      %p254 = scmp.eq.s32.totalorder %s27, 1
      %p255 = por %p253, %p254
      %p256 = scmp.ne.s32.totalorder %s247, %s248
      %p257 = scmp.eq.s32.totalorder %s27, 0
      %p258 = por %p256, %p257
      %p259 = scmp.ne.s32.totalorder %s247, %s248
      %p260 = scmp.eq.s32.totalorder %s28, 1
      %p261 = por %p259, %p260
      %p263 = scmp.ne.s32.totalorder %s248, %s262
      %p264 = scmp.eq.s32.totalorder %s28, 0
      %p265 = por %p263, %p264
      %s266 = ssub.s32 %s29, %s41
      %s267 = ssub.s32 %s30, %s37
      %s268 = sor.u32 %s266, %s267
      %p269 = scmp.eq.s32.totalorder %s268, 0
      %s271 = sadd.s32 %s270, 1
      %s272 = scalar_select %p269, %s270, %s271
      %p275 = pneg %p269
      %p276 = scmp.eq.s32.totalorder %s22, 1
      %p277 = por %p275, %p276
      %p278 = scmp.ne.s32.totalorder %s270, %s273
      %p279 = scmp.eq.s32.totalorder %s22, 0
      %p280 = por %p278, %p279
      %p281 = scmp.ne.s32.totalorder %s270, %s273
      %p282 = scmp.eq.s32.totalorder %s27, 1
      %p283 = por %p281, %p282
      %p284 = scmp.ne.s32.totalorder %s273, %s274
      %p285 = scmp.eq.s32.totalorder %s27, 0
      %p286 = por %p284, %p285
      %p287 = scmp.ne.s32.totalorder %s273, %s274
      %p288 = scmp.eq.s32.totalorder %s28, 1
      %p289 = por %p287, %p288
      %p291 = scmp.ne.s32.totalorder %s274, %s290
      %p292 = scmp.eq.s32.totalorder %s28, 0
      %p293 = por %p291, %p292
      %p294 = scmp.le.s32.totalorder 1, %s22
      %p295 = scmp.lt.s32.totalorder %s22, 3
      %p296 = pnand %p294, %p295
      %p297 = pneg %p296
      // Predicated region
      $region9: #{tpu_custom_call.1} parent=5 // pred_check
        _
      $region10: #{tpu_custom_call.1} parent=5 // pred_check_branch
        %299 = sbr.rel (%p296) target = $region12
      $region11: #{tpu_custom_call.1} parent=5 // pred_region
        %s300 = ssub.s32 %s22, 1
        // Predicated region
        $region13: #{tpu_custom_call.1} parent=11 // pred_check
          %p301 = pneg %p111
        $region14: #{tpu_custom_call.1} parent=11 // pred_check_branch
          %303 = sbr.rel (%p301) target = $region16
        $region15: #{tpu_custom_call.1} parent=11 // pred_region
          %305 = vsyncadd [#allocation4], 0
          %s307 = sshll.u32 %s2, 4
          %s308 = int_to_ptr.vmem [resolvable:$true] %s307
          %310 = dma.vmem_to_smem %s308, 64, [#allocation2], [#allocation4]
        $region16: #{tpu_custom_call.1} parent=11 // pred_fallthru
          _
        // Predicated region
        $region17: #{tpu_custom_call.1} parent=11 // pred_check
          %p311 = pneg %p132
        $region18: #{tpu_custom_call.1} parent=11 // pred_check_branch
          %313 = sbr.rel (%p311) target = $region20
        $region19: #{tpu_custom_call.1} parent=11 // pred_region
          %315 = vsyncadd [#allocation6], 0
          %s317 = sshll.u32 %s3, 4
          %s318 = int_to_ptr.vmem [resolvable:$true] %s317
          %320 = dma.vmem_to_smem %s318, 16, [#allocation5], [#allocation6]
        $region20: #{tpu_custom_call.1} parent=11 // pred_fallthru
          _
        // Predicated region
        $region21: #{tpu_custom_call.1} parent=11 // pred_check
          %p321 = pneg %p153
        $region22: #{tpu_custom_call.1} parent=11 // pred_check_branch
          %323 = sbr.rel (%p321) target = $region24
        $region23: #{tpu_custom_call.1} parent=11 // pred_region
          %325 = vsyncadd [#allocation6], 0
          %s327 = sshll.u32 %s4, 4
          %s328 = int_to_ptr.vmem [resolvable:$true] %s327
          %330 = dma.vmem_to_smem %s328, 64, [#allocation7], [#allocation6]
        $region24: #{tpu_custom_call.1} parent=11 // pred_fallthru
          _
        // Predicated region
        $region25: #{tpu_custom_call.1} parent=11 // pred_check
          %p331 = pneg %p174
        $region26: #{tpu_custom_call.1} parent=11 // pred_check_branch
          %333 = sbr.rel (%p331) target = $region28
        $region27: #{tpu_custom_call.1} parent=11 // pred_region
          %335 = vsyncadd [#allocation9], 0
          %s337 = sshll.u32 %s5, 4
          %s338 = int_to_ptr.vmem [resolvable:$true] %s337
          %340 = dma.vmem_to_smem %s338, 16, [#allocation8], [#allocation9]
        $region28: #{tpu_custom_call.1} parent=11 // pred_fallthru
          _
        // Predicated region
        $region29: #{tpu_custom_call.1} parent=11 // pred_check
          %p341 = pneg %p195
        $region30: #{tpu_custom_call.1} parent=11 // pred_check_branch
          %343 = sbr.rel (%p341) target = $region32
        $region31: #{tpu_custom_call.1} parent=11 // pred_region
          %345 = vsyncadd [#allocation9], 0
          %s347 = sshll.u32 %s6, 4
          %s348 = int_to_ptr.vmem [resolvable:$true] %s347
          %350 = dma.vmem_to_smem %s348, 16, [#allocation10], [#allocation9]
        $region32: #{tpu_custom_call.1} parent=11 // pred_fallthru
          _
        // Predicated region
        $region33: #{tpu_custom_call.1} parent=11 // pred_check
          %p351 = pneg %p216
        $region34: #{tpu_custom_call.1} parent=11 // pred_check_branch
          %353 = sbr.rel (%p351) target = $region36
        $region35: #{tpu_custom_call.1} parent=11 // pred_region
          _
        $region36: #{tpu_custom_call.1} parent=11 // pred_fallthru
          _
        // Predicated region
        $region37: #{tpu_custom_call.1} parent=11 // pred_check
          %p354 = pneg %p237
        $region38: #{tpu_custom_call.1} parent=11 // pred_check_branch
          %356 = sbr.rel (%p354) target = $region40
        $region39: #{tpu_custom_call.1} parent=11 // pred_region
          _
        $region40: #{tpu_custom_call.1} parent=11 // pred_fallthru
          _
        // Predicated region
        $region41: #{tpu_custom_call.1} parent=11 // pred_check
          %p357 = pneg %p258
        $region42: #{tpu_custom_call.1} parent=11 // pred_check_branch
          %359 = sbr.rel (%p357) target = $region44
        $region43: #{tpu_custom_call.1} parent=11 // pred_region
          _
        $region44: #{tpu_custom_call.1} parent=11 // pred_fallthru
          _
      $region12: #{tpu_custom_call.1} parent=5 // pred_fallthru
        _
      %p360 = scmp.lt.s32.totalorder %s22, 2
      // Predicated region
      $region45: #{tpu_custom_call.1} parent=5 // pred_check
        %p361 = pneg %p360
      $region46: #{tpu_custom_call.1} parent=5 // pred_check_branch
        %363 = sbr.rel (%p361) target = $region48
      $region47: #{tpu_custom_call.1} parent=5 // pred_region
        // Predicated region
        $region49: #{tpu_custom_call.1} parent=47 // pred_check
          %p364 = pneg %p56
        $region50: #{tpu_custom_call.1} parent=47 // pred_check_branch
          %366 = sbr.rel (%p364) target = $region52
        $region51: #{tpu_custom_call.1} parent=47 // pred_region
          %s367 = smul.u32 2, %s30
          %p368 = scmp.lt.s32.totalorder %s29, 1
          %s369 = scalar_select %p368, %s29, 1
          %p370 = scmp.lt.s32.totalorder %s367, 1
          %s371 = scalar_select %p370, %s367, 1
          %s372 = smul.addr %s369, 8
          %s373 = sadd.s32 %s371, %s372
          %s374 = smul.addr %s373, 8
          %s375 = scalar_lea.vmem %s0, %s374
          %s376 = smul.u32 2, %s30
        $region52: #{tpu_custom_call.1} parent=47 // pred_fallthru
          _
        // Predicated region
        $region53: #{tpu_custom_call.1} parent=47 // pred_check
          %p377 = pneg %p84
        $region54: #{tpu_custom_call.1} parent=47 // pred_check_branch
          %379 = sbr.rel (%p377) target = $region56
        $region55: #{tpu_custom_call.1} parent=47 // pred_region
          %s380 = smul.u32 2, %s30
          %p381 = scmp.lt.s32.totalorder %s29, 1
          %s382 = scalar_select %p381, %s29, 1
          %p383 = scmp.lt.s32.totalorder %s380, 1
          %s384 = scalar_select %p383, %s380, 1
          %s385 = smul.addr %s382, 8
          %s386 = sadd.s32 %s384, %s385
          %s387 = smul.addr %s386, 8
          %s388 = scalar_lea.vmem %s1, %s387
          %s389 = smul.u32 2, %s30
        $region56: #{tpu_custom_call.1} parent=47 // pred_fallthru
          _
      $region48: #{tpu_custom_call.1} parent=5 // pred_fallthru
        _
      %p390 = scmp.le.s32.totalorder 1, %s22
      %p391 = scmp.lt.s32.totalorder %s22, 3
      %p392 = pnand %p390, %p391
      %p393 = pneg %p392
      // Predicated region
      $region57: #{tpu_custom_call.1} parent=5 // pred_check
        _
      $region58: #{tpu_custom_call.1} parent=5 // pred_check_branch
        %395 = sbr.rel (%p392) target = $region60
      $region59: #{tpu_custom_call.1} parent=5 // pred_region
        %s396 = ssub.s32 %s22, 1
        // Predicated region
        $region61: #{tpu_custom_call.1} parent=59 // pred_check
          %p397 = pneg %p111
        $region62: #{tpu_custom_call.1} parent=59 // pred_check_branch
          %399 = sbr.rel (%p397) target = $region64
        $region63: #{tpu_custom_call.1} parent=59 // pred_region
          %401 = dma.done [#allocation4], 64
        $region64: #{tpu_custom_call.1} parent=59 // pred_fallthru
          _
        // Predicated region
        $region65: #{tpu_custom_call.1} parent=59 // pred_check
          %p402 = pneg %p132
        $region66: #{tpu_custom_call.1} parent=59 // pred_check_branch
          %404 = sbr.rel (%p402) target = $region68
        $region67: #{tpu_custom_call.1} parent=59 // pred_region
          %406 = dma.done [#allocation6], 16
        $region68: #{tpu_custom_call.1} parent=59 // pred_fallthru
          _
        // Predicated region
        $region69: #{tpu_custom_call.1} parent=59 // pred_check
          %p407 = pneg %p153
        $region70: #{tpu_custom_call.1} parent=59 // pred_check_branch
          %409 = sbr.rel (%p407) target = $region72
        $region71: #{tpu_custom_call.1} parent=59 // pred_region
          %411 = dma.done [#allocation6], 64
        $region72: #{tpu_custom_call.1} parent=59 // pred_fallthru
          _
        // Predicated region
        $region73: #{tpu_custom_call.1} parent=59 // pred_check
          %p412 = pneg %p174
        $region74: #{tpu_custom_call.1} parent=59 // pred_check_branch
          %414 = sbr.rel (%p412) target = $region76
        $region75: #{tpu_custom_call.1} parent=59 // pred_region
          %416 = dma.done [#allocation9], 16
        $region76: #{tpu_custom_call.1} parent=59 // pred_fallthru
          _
        // Predicated region
        $region77: #{tpu_custom_call.1} parent=59 // pred_check
          %p417 = pneg %p195
        $region78: #{tpu_custom_call.1} parent=59 // pred_check_branch
          %419 = sbr.rel (%p417) target = $region80
        $region79: #{tpu_custom_call.1} parent=59 // pred_region
          %421 = dma.done [#allocation9], 16
        $region80: #{tpu_custom_call.1} parent=59 // pred_fallthru
          _
        %422 = sfence
        %s423 = smul.u32 2, %s32
        %p424 = scmp.lt.s32.totalorder %s31, 1
        %s425 = scalar_select %p424, %s31, 1
        %p426 = scmp.lt.s32.totalorder %s423, 1
        %s427 = scalar_select %p426, %s423, 1
        %s428 = smul.addr %s425, 8
        %s429 = sadd.s32 %s427, %s428
        %s430 = smul.addr %s429, 8
        %s431 = scalar_lea.vmem %s0, %s430
        %p432 = pneg %p62
        %p433 = pneg %p59
        %s434 = smul.u32 2, %s32
        %p435 = scmp.lt.s32.totalorder %s31, 1
        %s436 = scalar_select %p435, %s31, 1
        %p437 = scmp.lt.s32.totalorder %s434, 1
        %s438 = scalar_select %p437, %s434, 1
        %s439 = smul.addr %s436, 8
        %s440 = sadd.s32 %s438, %s439
        %s441 = smul.addr %s440, 8
        %s442 = scalar_lea.vmem %s1, %s441
        %p443 = pneg %p90
        %p444 = pneg %p87
        %p445 = pneg %p111
        %p446 = pneg %p108
        %p447 = pneg %p132
        %p448 = pneg %p129
        %p449 = pneg %p153
        %p450 = pneg %p150
        %p451 = pneg %p174
        %p452 = pneg %p171
        %p453 = pneg %p195
        %p454 = pneg %p192
        %p455 = pneg %p216
        %p456 = pneg %p213
        %p457 = pneg %p237
        %p458 = pneg %p234
        %p459 = pneg %p258
        %p460 = pneg %p255
        %p461 = pneg %p286
        %p462 = pneg %p283
        %s463 = sand.u32 %s273, 1
        %s464 = scalar_lea.sflag [#allocation3], %s463
        %s465 = sand.u32 %s273, 1
        %s466 = smul.addr %s465, 256
        %s467 = scalar_lea.vmem [#allocation11], %s466
        %s468 = smul.u32 2, %s32
        %p469 = scmp.lt.s32.totalorder %s31, 1
        %s470 = scalar_select %p469, %s31, 1
        %p471 = scmp.lt.s32.totalorder %s468, 1
        %s472 = scalar_select %p471, %s468, 1
        %s473 = smul.addr %s470, 8
        %s474 = sadd.s32 %s472, %s473
        %s475 = smul.addr %s474, 8
        %s476 = scalar_lea.vmem %s0, %s475
        %s477 = smul.u32 2, %s32
        %s478 = smul.u32 2, %s32
        %p479 = scmp.lt.s32.totalorder %s31, 1
        %s480 = scalar_select %p479, %s31, 1
        %p481 = scmp.lt.s32.totalorder %s478, 1
        %s482 = scalar_select %p481, %s478, 1
        %s483 = smul.addr %s480, 8
        %s484 = sadd.s32 %s482, %s483
        %s485 = smul.addr %s484, 8
        %s486 = scalar_lea.vmem %s1, %s485
        %s487 = smul.u32 2, %s32
        %s488 = smul.u32 2, %s32
        %v489 = vld [vmem:[%s476] sm:$0xff]
        %v490 = vld [vmem:[%s476 + $0x8] sm:$0xff]
        %v491 = vld [vmem:[%s476 + $0x10] sm:$0xff]
        %v492 = vld [vmem:[%s476 + $0x18] sm:$0xff]
        %v493 = vld [vmem:[%s476 + $0x20] sm:$0xff]
        %v494 = vld [vmem:[%s476 + $0x28] sm:$0xff]
        %v495 = vld [vmem:[%s476 + $0x30] sm:$0xff]
        %v496 = vld [vmem:[%s476 + $0x38] sm:$0xff]
        %v497 = vld [vmem:[%s486] sm:$0xff]
        %v498 = vld [vmem:[%s486 + $0x8] sm:$0xff]
        %v499 = vld [vmem:[%s486 + $0x10] sm:$0xff]
        %v500 = vld [vmem:[%s486 + $0x18] sm:$0xff]
        %v501 = vld [vmem:[%s486 + $0x20] sm:$0xff]
        %v502 = vld [vmem:[%s486 + $0x28] sm:$0xff]
        %v503 = vld [vmem:[%s486 + $0x30] sm:$0xff]
        %v504 = vld [vmem:[%s486 + $0x38] sm:$0xff]
        %s505 = sld [smem:[#allocation2]]
        %v506 = vstv %s505
        %v507 = vmul.f32 %v506, %v489
        %v508 = vmul.f32 %v506, %v490
        %v509 = vadd.f32 %v507, 0.0
        %v510 = vadd.f32 %v508, 0.0
        %s511 = sld [smem:[#allocation2 + $0x1]]
        %v512 = vstv %s511
        %v513 = vmul.f32 %v512, %v491
        %v514 = vmul.f32 %v512, %v492
        %v515 = vadd.f32 %v509, %v513
        %v516 = vadd.f32 %v510, %v514
        %s517 = sld [smem:[#allocation2 + $0x2]]
        %v518 = vstv %s517
        %v519 = vmul.f32 %v518, %v493
        %v520 = vmul.f32 %v518, %v494
        %v521 = vadd.f32 %v515, %v519
        %v522 = vadd.f32 %v516, %v520
        %s523 = sld [smem:[#allocation2 + $0x3]]
        %v524 = vstv %s523
        %v525 = vmul.f32 %v524, %v495
        %v526 = vmul.f32 %v524, %v496
        %v527 = vadd.f32 %v521, %v525
        %v528 = vadd.f32 %v522, %v526
        %s529 = sld [smem:[#allocation2 + $0x4]]
        %v530 = vstv %s529
        %v531 = vmul.f32 %v530, %v497
        %v532 = vmul.f32 %v530, %v498
        %v533 = vadd.f32 %v527, %v531
        %v534 = vadd.f32 %v528, %v532
        %s535 = sld [smem:[#allocation2 + $0x5]]
        %v536 = vstv %s535
        %v537 = vmul.f32 %v536, %v499
        %v538 = vmul.f32 %v536, %v500
        %v539 = vadd.f32 %v533, %v537
        %v540 = vadd.f32 %v534, %v538
        %s541 = sld [smem:[#allocation2 + $0x6]]
        %v542 = vstv %s541
        %v543 = vmul.f32 %v542, %v501
        %v544 = vmul.f32 %v542, %v502
        %v545 = vadd.f32 %v539, %v543
        %v546 = vadd.f32 %v540, %v544
        %s547 = sld [smem:[#allocation2 + $0x7]]
        %v548 = vstv %s547
        %v549 = vmul.f32 %v548, %v503
        %v550 = vmul.f32 %v548, %v504
        %v551 = vadd.f32 %v545, %v549
        %v552 = vadd.f32 %v546, %v550
        %s553 = sld [smem:[#allocation5]]
        %v554 = vstv %s553
        %v555 = vadd.f32 %v551, %v554
        %v556 = vadd.f32 %v552, %v554
        %v557 = vtanh.pop %v555
        %v558 = vtanh.pop %v556
        %v559 = vmul.f32 %v557, %v497
        %v560 = vmul.f32 %v558, %v498
        %s561 = sld [smem:[#allocation2 + $0x80]]
        %v562 = vstv %s561
        %v563 = vmul.f32 %v562, %v489
        %v564 = vmul.f32 %v562, %v490
        %v565 = vadd.f32 %v563, 0.0
        %v566 = vadd.f32 %v564, 0.0
        %s567 = sld [smem:[#allocation2 + $0x81]]
        %v568 = vstv %s567
        %v569 = vmul.f32 %v568, %v491
        %v570 = vmul.f32 %v568, %v492
        %v571 = vadd.f32 %v565, %v569
        %v572 = vadd.f32 %v566, %v570
        %s573 = sld [smem:[#allocation2 + $0x82]]
        %v574 = vstv %s573
        %v575 = vmul.f32 %v574, %v493
        %v576 = vmul.f32 %v574, %v494
        %v577 = vadd.f32 %v571, %v575
        %v578 = vadd.f32 %v572, %v576
        %s579 = sld [smem:[#allocation2 + $0x83]]
        %v580 = vstv %s579
        %v581 = vmul.f32 %v580, %v495
        %v582 = vmul.f32 %v580, %v496
        %v583 = vadd.f32 %v577, %v581
        %v584 = vadd.f32 %v578, %v582
        %s585 = sld [smem:[#allocation2 + $0x84]]
        %v586 = vstv %s585
        %v587 = vmul.f32 %v586, %v497
        %v588 = vmul.f32 %v586, %v498
        %v589 = vadd.f32 %v583, %v587
        %v590 = vadd.f32 %v584, %v588
        %s591 = sld [smem:[#allocation2 + $0x85]]
        %v592 = vstv %s591
        %v593 = vmul.f32 %v592, %v499
        %v594 = vmul.f32 %v592, %v500
        %v595 = vadd.f32 %v589, %v593
        %v596 = vadd.f32 %v590, %v594
        %s597 = sld [smem:[#allocation2 + $0x86]]
        %v598 = vstv %s597
        %v599 = vmul.f32 %v598, %v501
        %v600 = vmul.f32 %v598, %v502
        %v601 = vadd.f32 %v595, %v599
        %v602 = vadd.f32 %v596, %v600
        %s603 = sld [smem:[#allocation2 + $0x87]]
        %v604 = vstv %s603
        %v605 = vmul.f32 %v604, %v503
        %v606 = vmul.f32 %v604, %v504
        %v607 = vadd.f32 %v601, %v605
        %v608 = vadd.f32 %v602, %v606
        %s609 = sld [smem:[#allocation5 + $0x1]]
        %v610 = vstv %s609
        %v611 = vadd.f32 %v607, %v610
        %v612 = vadd.f32 %v608, %v610
        %v613 = vtanh.pop %v611
        %v614 = vtanh.pop %v612
        %v615 = vmul.f32 %v613, %v499
        %v616 = vmul.f32 %v614, %v500
        %s617 = sld [smem:[#allocation2 + $0x100]]
        %v618 = vstv %s617
        %v619 = vmul.f32 %v618, %v489
        %v620 = vmul.f32 %v618, %v490
        %v621 = vadd.f32 %v619, 0.0
        %v622 = vadd.f32 %v620, 0.0
        %s623 = sld [smem:[#allocation2 + $0x101]]
        %v624 = vstv %s623
        %v625 = vmul.f32 %v624, %v491
        %v626 = vmul.f32 %v624, %v492
        %v627 = vadd.f32 %v621, %v625
        %v628 = vadd.f32 %v622, %v626
        %s629 = sld [smem:[#allocation2 + $0x102]]
        %v630 = vstv %s629
        %v631 = vmul.f32 %v630, %v493
        %v632 = vmul.f32 %v630, %v494
        %v633 = vadd.f32 %v627, %v631
        %v634 = vadd.f32 %v628, %v632
        %s635 = sld [smem:[#allocation2 + $0x103]]
        %v636 = vstv %s635
        %v637 = vmul.f32 %v636, %v495
        %v638 = vmul.f32 %v636, %v496
        %v639 = vadd.f32 %v633, %v637
        %v640 = vadd.f32 %v634, %v638
        %s641 = sld [smem:[#allocation2 + $0x104]]
        %v642 = vstv %s641
        %v643 = vmul.f32 %v642, %v497
        %v644 = vmul.f32 %v642, %v498
        %v645 = vadd.f32 %v639, %v643
        %v646 = vadd.f32 %v640, %v644
        %s647 = sld [smem:[#allocation2 + $0x105]]
        %v648 = vstv %s647
        %v649 = vmul.f32 %v648, %v499
        %v650 = vmul.f32 %v648, %v500
        %v651 = vadd.f32 %v645, %v649
        %v652 = vadd.f32 %v646, %v650
        %s653 = sld [smem:[#allocation2 + $0x106]]
        %v654 = vstv %s653
        %v655 = vmul.f32 %v654, %v501
        %v656 = vmul.f32 %v654, %v502
        %v657 = vadd.f32 %v651, %v655
        %v658 = vadd.f32 %v652, %v656
        %s659 = sld [smem:[#allocation2 + $0x107]]
        %v660 = vstv %s659
        %v661 = vmul.f32 %v660, %v503
        %v662 = vmul.f32 %v660, %v504
        %v663 = vadd.f32 %v657, %v661
        %v664 = vadd.f32 %v658, %v662
        %s665 = sld [smem:[#allocation5 + $0x2]]
        %v666 = vstv %s665
        %v667 = vadd.f32 %v663, %v666
        %v668 = vadd.f32 %v664, %v666
        %v669 = vtanh.pop %v667
        %v670 = vtanh.pop %v668
        %v671 = vmul.f32 %v669, %v501
        %v672 = vmul.f32 %v670, %v502
        %s673 = sld [smem:[#allocation2 + $0x180]]
        %v674 = vstv %s673
        %v675 = vmul.f32 %v674, %v489
        %v676 = vmul.f32 %v674, %v490
        %v677 = vadd.f32 %v675, 0.0
        %v678 = vadd.f32 %v676, 0.0
        %s679 = sld [smem:[#allocation2 + $0x181]]
        %v680 = vstv %s679
        %v681 = vmul.f32 %v680, %v491
        %v682 = vmul.f32 %v680, %v492
        %v683 = vadd.f32 %v677, %v681
        %v684 = vadd.f32 %v678, %v682
        %s685 = sld [smem:[#allocation2 + $0x182]]
        %v686 = vstv %s685
        %v687 = vmul.f32 %v686, %v493
        %v688 = vmul.f32 %v686, %v494
        %v689 = vadd.f32 %v683, %v687
        %v690 = vadd.f32 %v684, %v688
        %s691 = sld [smem:[#allocation2 + $0x183]]
        %v692 = vstv %s691
        %v693 = vmul.f32 %v692, %v495
        %v694 = vmul.f32 %v692, %v496
        %v695 = vadd.f32 %v689, %v693
        %v696 = vadd.f32 %v690, %v694
        %s697 = sld [smem:[#allocation2 + $0x184]]
        %v698 = vstv %s697
        %v699 = vmul.f32 %v698, %v497
        %v700 = vmul.f32 %v698, %v498
        %v701 = vadd.f32 %v695, %v699
        %v702 = vadd.f32 %v696, %v700
        %s703 = sld [smem:[#allocation2 + $0x185]]
        %v704 = vstv %s703
        %v705 = vmul.f32 %v704, %v499
        %v706 = vmul.f32 %v704, %v500
        %v707 = vadd.f32 %v701, %v705
        %v708 = vadd.f32 %v702, %v706
        %s709 = sld [smem:[#allocation2 + $0x186]]
        %v710 = vstv %s709
        %v711 = vmul.f32 %v710, %v501
        %v712 = vmul.f32 %v710, %v502
        %v713 = vadd.f32 %v707, %v711
        %v714 = vadd.f32 %v708, %v712
        %s715 = sld [smem:[#allocation2 + $0x187]]
        %v716 = vstv %s715
        %v717 = vmul.f32 %v716, %v503
        %v718 = vmul.f32 %v716, %v504
        %v719 = vadd.f32 %v713, %v717
        %v720 = vadd.f32 %v714, %v718
        %s721 = sld [smem:[#allocation5 + $0x3]]
        %v722 = vstv %s721
        %v723 = vadd.f32 %v719, %v722
        %v724 = vadd.f32 %v720, %v722
        %v725 = vtanh.pop %v723
        %v726 = vtanh.pop %v724
        %v727 = vmul.f32 %v725, %v503
        %v728 = vmul.f32 %v726, %v504
        %s729 = sld [smem:[#allocation7]]
        %v730 = vstv %s729
        %v731 = vmul.f32 %v730, %v559
        %v732 = vmul.f32 %v730, %v560
        %v733 = vadd.f32 %v731, 0.0
        %v734 = vadd.f32 %v732, 0.0
        %s735 = sld [smem:[#allocation7 + $0x1]]
        %v736 = vstv %s735
        %v737 = vmul.f32 %v736, %v615
        %v738 = vmul.f32 %v736, %v616
        %v739 = vadd.f32 %v733, %v737
        %v740 = vadd.f32 %v734, %v738
        %s741 = sld [smem:[#allocation7 + $0x2]]
        %v742 = vstv %s741
        %v743 = vmul.f32 %v742, %v671
        %v744 = vmul.f32 %v742, %v672
        %v745 = vadd.f32 %v739, %v743
        %v746 = vadd.f32 %v740, %v744
        %s747 = sld [smem:[#allocation7 + $0x3]]
        %v748 = vstv %s747
        %v749 = vmul.f32 %v748, %v727
        %v750 = vmul.f32 %v748, %v728
        %v751 = vadd.f32 %v745, %v749
        %v752 = vadd.f32 %v746, %v750
        %s753 = sld [smem:[#allocation8]]
        %v754 = vstv %s753
        %v755 = vadd.f32 %v751, %v754
        %v756 = vadd.f32 %v752, %v754
        %v757 = vmax.f32 %v755, 0.0
        %v758 = vmax.f32 %v756, 0.0
        %s759 = sld [smem:[#allocation10]]
        %v760 = vmin.f32 %v755, 0.0
        %v761 = vmin.f32 %v756, 0.0
        %v762 = vstv %s759
        %v763 = vmul.f32 %v762, %v760
        %v764 = vmul.f32 %v762, %v761
        %v765 = vadd.f32 %v757, %v763
        %v766 = vadd.f32 %v758, %v764
        %s767 = sld [smem:[#allocation7 + $0x80]]
        %v768 = vstv %s767
        %v769 = vmul.f32 %v768, %v559
        %v770 = vmul.f32 %v768, %v560
        %v771 = vadd.f32 %v769, 0.0
        %v772 = vadd.f32 %v770, 0.0
        %s773 = sld [smem:[#allocation7 + $0x81]]
        %v774 = vstv %s773
        %v775 = vmul.f32 %v774, %v615
        %v776 = vmul.f32 %v774, %v616
        %v777 = vadd.f32 %v771, %v775
        %v778 = vadd.f32 %v772, %v776
        %s779 = sld [smem:[#allocation7 + $0x82]]
        %v780 = vstv %s779
        %v781 = vmul.f32 %v780, %v671
        %v782 = vmul.f32 %v780, %v672
        %v783 = vadd.f32 %v777, %v781
        %v784 = vadd.f32 %v778, %v782
        %s785 = sld [smem:[#allocation7 + $0x83]]
        %v786 = vstv %s785
        %v787 = vmul.f32 %v786, %v727
        %v788 = vmul.f32 %v786, %v728
        %v789 = vadd.f32 %v783, %v787
        %v790 = vadd.f32 %v784, %v788
        %s791 = sld [smem:[#allocation8 + $0x1]]
        %v792 = vstv %s791
        %v793 = vadd.f32 %v789, %v792
        %v794 = vadd.f32 %v790, %v792
        %v795 = vmax.f32 %v793, 0.0
        %v796 = vmax.f32 %v794, 0.0
        %s797 = sld [smem:[#allocation10 + $0x1]]
        %v798 = vmin.f32 %v793, 0.0
        %v799 = vmin.f32 %v794, 0.0
        %v800 = vstv %s797
        %v801 = vmul.f32 %v800, %v798
        %v802 = vmul.f32 %v800, %v799
        %v803 = vadd.f32 %v795, %v801
        %v804 = vadd.f32 %v796, %v802
        %s805 = sld [smem:[#allocation7 + $0x100]]
        %v806 = vstv %s805
        %v807 = vmul.f32 %v806, %v559
        %v808 = vmul.f32 %v806, %v560
        %v809 = vadd.f32 %v807, 0.0
        %v810 = vadd.f32 %v808, 0.0
        %s811 = sld [smem:[#allocation7 + $0x101]]
        %v812 = vstv %s811
        %v813 = vmul.f32 %v812, %v615
        %v814 = vmul.f32 %v812, %v616
        %v815 = vadd.f32 %v809, %v813
        %v816 = vadd.f32 %v810, %v814
        %s817 = sld [smem:[#allocation7 + $0x102]]
        %v818 = vstv %s817
        %v819 = vmul.f32 %v818, %v671
        %v820 = vmul.f32 %v818, %v672
        %v821 = vadd.f32 %v815, %v819
        %v822 = vadd.f32 %v816, %v820
        %s823 = sld [smem:[#allocation7 + $0x103]]
        %v824 = vstv %s823
        %v825 = vmul.f32 %v824, %v727
        %v826 = vmul.f32 %v824, %v728
        %v827 = vadd.f32 %v821, %v825
        %v828 = vadd.f32 %v822, %v826
        %s829 = sld [smem:[#allocation8 + $0x2]]
        %v830 = vstv %s829
        %v831 = vadd.f32 %v827, %v830
        %v832 = vadd.f32 %v828, %v830
        %v833 = vmax.f32 %v831, 0.0
        %v834 = vmax.f32 %v832, 0.0
        %s835 = sld [smem:[#allocation10 + $0x2]]
        %v836 = vmin.f32 %v831, 0.0
        %v837 = vmin.f32 %v832, 0.0
        %v838 = vstv %s835
        %v839 = vmul.f32 %v838, %v836
        %v840 = vmul.f32 %v838, %v837
        %v841 = vadd.f32 %v833, %v839
        %v842 = vadd.f32 %v834, %v840
        %s843 = sld [smem:[#allocation7 + $0x180]]
        %v844 = vstv %s843
        %v845 = vmul.f32 %v844, %v559
        %v846 = vmul.f32 %v844, %v560
        %v847 = vadd.f32 %v845, 0.0
        %v848 = vadd.f32 %v846, 0.0
        %s849 = sld [smem:[#allocation7 + $0x181]]
        %v850 = vstv %s849
        %v851 = vmul.f32 %v850, %v615
        %v852 = vmul.f32 %v850, %v616
        %v853 = vadd.f32 %v847, %v851
        %v854 = vadd.f32 %v848, %v852
        %s855 = sld [smem:[#allocation7 + $0x182]]
        %v856 = vstv %s855
        %v857 = vmul.f32 %v856, %v671
        %v858 = vmul.f32 %v856, %v672
        %v859 = vadd.f32 %v853, %v857
        %v860 = vadd.f32 %v854, %v858
        %s861 = sld [smem:[#allocation7 + $0x183]]
        %v862 = vstv %s861
        %v863 = vmul.f32 %v862, %v727
        %v864 = vmul.f32 %v862, %v728
        %v865 = vadd.f32 %v859, %v863
        %v866 = vadd.f32 %v860, %v864
        %s867 = sld [smem:[#allocation8 + $0x3]]
        %v868 = vstv %s867
        %v869 = vadd.f32 %v865, %v868
        %v870 = vadd.f32 %v866, %v868
        %v871 = vmax.f32 %v869, 0.0
        %v872 = vmax.f32 %v870, 0.0
        %s873 = sld [smem:[#allocation10 + $0x3]]
        %v874 = vmin.f32 %v869, 0.0
        %v875 = vmin.f32 %v870, 0.0
        %v876 = vstv %s873
        %v877 = vmul.f32 %v876, %v874
        %v878 = vmul.f32 %v876, %v875
        %v879 = vadd.f32 %v871, %v877
        %v880 = vadd.f32 %v872, %v878
        %v881 = vld [vmem:[%s7] sm:$0xff]
        %v882 = vld [vmem:[%s7 + $0x8] sm:$0xff]
        %v883 = vld [vmem:[%s7 + $0x10] sm:$0xff]
        %v884 = vld [vmem:[%s7 + $0x18] sm:$0xff]
        %v885 = vld [vmem:[%s7 + $0x20] sm:$0xff]
        %v886 = vld [vmem:[%s7 + $0x28] sm:$0xff]
        %v887 = vld [vmem:[%s7 + $0x30] sm:$0xff]
        %v888 = vld [vmem:[%s7 + $0x38] sm:$0xff]
        %v889 = vld [vmem:[%s7 + $0x40] sm:$0xff]
        %v890 = vld [vmem:[%s7 + $0x48] sm:$0xff]
        %v891 = vld [vmem:[%s7 + $0x50] sm:$0xff]
        %v892 = vld [vmem:[%s7 + $0x58] sm:$0xff]
        %v893 = vld [vmem:[%s7 + $0x60] sm:$0xff]
        %v894 = vld [vmem:[%s7 + $0x68] sm:$0xff]
        %v895 = vld [vmem:[%s7 + $0x70] sm:$0xff]
        %v896 = vld [vmem:[%s7 + $0x78] sm:$0xff]
        %v897 = vld [vmem:[%s8] sm:$0xff]
        %v898 = vld [vmem:[%s8 + $0x8] sm:$0xff]
        %v899 = vld [vmem:[%s8 + $0x10] sm:$0xff]
        %v900 = vld [vmem:[%s8 + $0x18] sm:$0xff]
        %v901 = vld [vmem:[%s8 + $0x20] sm:$0xff]
        %v902 = vld [vmem:[%s8 + $0x28] sm:$0xff]
        %v903 = vld [vmem:[%s8 + $0x30] sm:$0xff]
        %v904 = vld [vmem:[%s8 + $0x38] sm:$0xff]
        %v905 = vld [vmem:[%s8 + $0x40] sm:$0xff]
        %v906 = vld [vmem:[%s8 + $0x48] sm:$0xff]
        %v907 = vld [vmem:[%s8 + $0x50] sm:$0xff]
        %v908 = vld [vmem:[%s8 + $0x58] sm:$0xff]
        %v909 = vld [vmem:[%s8 + $0x60] sm:$0xff]
        %v910 = vld [vmem:[%s8 + $0x68] sm:$0xff]
        %v911 = vld [vmem:[%s8 + $0x70] sm:$0xff]
        %v912 = vld [vmem:[%s8 + $0x78] sm:$0xff]
        %914 = vset.pattern.permute.xlu0 0
        %915 = vperm.xlu0 %914, %v897
        %v916 = vpop.permute.xlu0 %915
        %919 = vset.pattern.permute.xlu0 0
        %920 = vperm.xlu0 %919, %v898
        %v921 = vpop.permute.xlu0 %920
        %924 = vset.pattern.permute.xlu0 0
        %925 = vperm.xlu0 %924, %v899
        %v926 = vpop.permute.xlu0 %925
        %929 = vset.pattern.permute.xlu0 0
        %930 = vperm.xlu0 %929, %v900
        %v931 = vpop.permute.xlu0 %930
        %934 = vset.pattern.permute.xlu0 0
        %935 = vperm.xlu0 %934, %v901
        %v936 = vpop.permute.xlu0 %935
        %939 = vset.pattern.permute.xlu0 0
        %940 = vperm.xlu0 %939, %v902
        %v941 = vpop.permute.xlu0 %940
        %944 = vset.pattern.permute.xlu0 0
        %945 = vperm.xlu0 %944, %v903
        %v946 = vpop.permute.xlu0 %945
        %949 = vset.pattern.permute.xlu0 0
        %950 = vperm.xlu0 %949, %v904
        %v951 = vpop.permute.xlu0 %950
        %954 = vset.pattern.permute.xlu0 0
        %955 = vperm.xlu0 %954, %v905
        %v956 = vpop.permute.xlu0 %955
        %959 = vset.pattern.permute.xlu0 0
        %960 = vperm.xlu0 %959, %v906
        %v961 = vpop.permute.xlu0 %960
        %964 = vset.pattern.permute.xlu0 0
        %965 = vperm.xlu0 %964, %v907
        %v966 = vpop.permute.xlu0 %965
        %969 = vset.pattern.permute.xlu0 0
        %970 = vperm.xlu0 %969, %v908
        %v971 = vpop.permute.xlu0 %970
        %974 = vset.pattern.permute.xlu0 0
        %975 = vperm.xlu0 %974, %v909
        %v976 = vpop.permute.xlu0 %975
        %979 = vset.pattern.permute.xlu0 0
        %980 = vperm.xlu0 %979, %v910
        %v981 = vpop.permute.xlu0 %980
        %984 = vset.pattern.permute.xlu0 0
        %985 = vperm.xlu0 %984, %v911
        %v986 = vpop.permute.xlu0 %985
        %989 = vset.pattern.permute.xlu0 0
        %990 = vperm.xlu0 %989, %v912
        %v991 = vpop.permute.xlu0 %990
        %vm993 = vcmask 261120
        %v995 = vsel %vm993, %v881, 0
        %v998 = vsel %vm993, %v882, 0
        %v1001 = vsel %vm993, %v883, 0
        %v1004 = vsel %vm993, %v884, 0
        %v1007 = vsel %vm993, %v885, 0
        %v1010 = vsel %vm993, %v886, 0
        %v1013 = vsel %vm993, %v887, 0
        %v1016 = vsel %vm993, %v888, 0
        %v1019 = vsel %vm993, %v889, 0
        %v1022 = vsel %vm993, %v890, 0
        %v1025 = vsel %vm993, %v891, 0
        %v1028 = vsel %vm993, %v892, 0
        %v1031 = vsel %vm993, %v893, 0
        %v1034 = vsel %vm993, %v894, 0
        %v1037 = vsel %vm993, %v895, 0
        %v1040 = vsel %vm993, %v896, 0
        %1042 = vmatpush.msra.mxu0 0.0
        %1043 = vmatpush.msra.mxu0 0.0
        %1044 = vmatpush.msra.mxu0 0.0
        %1045 = vmatpush.msra.mxu0 0.0
        %1046 = vmatpush.msra.mxu0 0.0
        %1047 = vmatpush.msra.mxu0 0.0
        %1048 = vmatpush.msra.mxu0 0.0
        %1049 = vmatpush.msra.mxu0 0.0
        %1050 = vmatpush.msra.mxu0 0.0
        %1051 = vmatpush.msra.mxu0 0.0
        %1052 = vmatpush.msra.mxu0 0.0
        %1053 = vmatpush.msra.mxu0 0.0
        %1054 = vmatpush.msra.mxu0 %v879
        %1055 = vmatpush.msra.mxu0 %v841
        %1056 = vmatpush.msra.mxu0 %v803
        %1057 = vmatpush.msra.mxu0 %v765
        %1058 = vmatmul.f32.gmra.mxu0 %v995
        %v1059 = vpop.f32.mrf.mxu0
        %v1060 = vadd.f32 %v916, %v1059
        %1061 = vmatmul.f32.gmra.mxu0 %v998
        %v1062 = vpop.f32.mrf.mxu0
        %v1063 = vadd.f32 %v921, %v1062
        %1064 = vmatmul.f32.gmra.mxu0 %v1001
        %v1065 = vpop.f32.mrf.mxu0
        %v1066 = vadd.f32 %v926, %v1065
        %1067 = vmatmul.f32.gmra.mxu0 %v1004
        %v1068 = vpop.f32.mrf.mxu0
        %v1069 = vadd.f32 %v931, %v1068
        %1070 = vmatmul.f32.gmra.mxu0 %v1007
        %v1071 = vpop.f32.mrf.mxu0
        %v1072 = vadd.f32 %v936, %v1071
        %1073 = vmatmul.f32.gmra.mxu0 %v1010
        %v1074 = vpop.f32.mrf.mxu0
        %v1075 = vadd.f32 %v941, %v1074
        %1076 = vmatmul.f32.gmra.mxu0 %v1013
        %v1077 = vpop.f32.mrf.mxu0
        %v1078 = vadd.f32 %v946, %v1077
        %1079 = vmatmul.f32.gmra.mxu0 %v1016
        %v1080 = vpop.f32.mrf.mxu0
        %v1081 = vadd.f32 %v951, %v1080
        %1082 = vmatmul.f32.gmra.mxu0 %v1019
        %v1083 = vpop.f32.mrf.mxu0
        %v1084 = vadd.f32 %v956, %v1083
        %1085 = vmatmul.f32.gmra.mxu0 %v1022
        %v1086 = vpop.f32.mrf.mxu0
        %v1087 = vadd.f32 %v961, %v1086
        %1088 = vmatmul.f32.gmra.mxu0 %v1025
        %v1089 = vpop.f32.mrf.mxu0
        %v1090 = vadd.f32 %v966, %v1089
        %1091 = vmatmul.f32.gmra.mxu0 %v1028
        %v1092 = vpop.f32.mrf.mxu0
        %v1093 = vadd.f32 %v971, %v1092
        %1094 = vmatmul.f32.gmra.mxu0 %v1031
        %v1095 = vpop.f32.mrf.mxu0
        %v1096 = vadd.f32 %v976, %v1095
        %1097 = vmatmul.f32.gmra.mxu0 %v1034
        %v1098 = vpop.f32.mrf.mxu0
        %v1099 = vadd.f32 %v981, %v1098
        %1100 = vmatmul.f32.gmra.mxu0 %v1037
        %v1101 = vpop.f32.mrf.mxu0
        %v1102 = vadd.f32 %v986, %v1101
        %1103 = vmatmul.f32.gmra.mxu0 %v1040
        %v1104 = vpop.f32.mrf.mxu0
        %v1105 = vadd.f32 %v991, %v1104
        %1106 = vdwg.mxu0
        %1107 = vmatpush.msra.mxu0 0.0
        %1108 = vmatpush.msra.mxu0 0.0
        %1109 = vmatpush.msra.mxu0 0.0
        %1110 = vmatpush.msra.mxu0 0.0
        %1111 = vmatpush.msra.mxu0 0.0
        %1112 = vmatpush.msra.mxu0 0.0
        %1113 = vmatpush.msra.mxu0 0.0
        %1114 = vmatpush.msra.mxu0 0.0
        %1115 = vmatpush.msra.mxu0 0.0
        %1116 = vmatpush.msra.mxu0 0.0
        %1117 = vmatpush.msra.mxu0 0.0
        %1118 = vmatpush.msra.mxu0 0.0
        %1119 = vmatpush.msra.mxu0 %v880
        %1120 = vmatpush.msra.mxu0 %v842
        %1121 = vmatpush.msra.mxu0 %v804
        %1122 = vmatpush.msra.mxu0 %v766
        %1123 = vmatmul.f32.gmra.mxu0 %v995
        %v1124 = vpop.f32.mrf.mxu0
        %v1125 = vadd.f32 %v916, %v1124
        %1126 = vmatmul.f32.gmra.mxu0 %v998
        %v1127 = vpop.f32.mrf.mxu0
        %v1128 = vadd.f32 %v921, %v1127
        %1129 = vmatmul.f32.gmra.mxu0 %v1001
        %v1130 = vpop.f32.mrf.mxu0
        %v1131 = vadd.f32 %v926, %v1130
        %1132 = vmatmul.f32.gmra.mxu0 %v1004
        %v1133 = vpop.f32.mrf.mxu0
        %v1134 = vadd.f32 %v931, %v1133
        %1135 = vmatmul.f32.gmra.mxu0 %v1007
        %v1136 = vpop.f32.mrf.mxu0
        %v1137 = vadd.f32 %v936, %v1136
        %1138 = vmatmul.f32.gmra.mxu0 %v1010
        %v1139 = vpop.f32.mrf.mxu0
        %v1140 = vadd.f32 %v941, %v1139
        %1141 = vmatmul.f32.gmra.mxu0 %v1013
        %v1142 = vpop.f32.mrf.mxu0
        %v1143 = vadd.f32 %v946, %v1142
        %1144 = vmatmul.f32.gmra.mxu0 %v1016
        %v1145 = vpop.f32.mrf.mxu0
        %v1146 = vadd.f32 %v951, %v1145
        %1147 = vmatmul.f32.gmra.mxu0 %v1019
        %v1148 = vpop.f32.mrf.mxu0
        %v1149 = vadd.f32 %v956, %v1148
        %1150 = vmatmul.f32.gmra.mxu0 %v1022
        %v1151 = vpop.f32.mrf.mxu0
        %v1152 = vadd.f32 %v961, %v1151
        %1153 = vmatmul.f32.gmra.mxu0 %v1025
        %v1154 = vpop.f32.mrf.mxu0
        %v1155 = vadd.f32 %v966, %v1154
        %1156 = vmatmul.f32.gmra.mxu0 %v1028
        %v1157 = vpop.f32.mrf.mxu0
        %v1158 = vadd.f32 %v971, %v1157
        %1159 = vmatmul.f32.gmra.mxu0 %v1031
        %v1160 = vpop.f32.mrf.mxu0
        %v1161 = vadd.f32 %v976, %v1160
        %1162 = vmatmul.f32.gmra.mxu0 %v1034
        %v1163 = vpop.f32.mrf.mxu0
        %v1164 = vadd.f32 %v981, %v1163
        %1165 = vmatmul.f32.gmra.mxu0 %v1037
        %v1166 = vpop.f32.mrf.mxu0
        %v1167 = vadd.f32 %v986, %v1166
        %1168 = vmatmul.f32.gmra.mxu0 %v1040
        %v1169 = vpop.f32.mrf.mxu0
        %v1170 = vadd.f32 %v991, %v1169
        %1171 = vdwg.mxu0
        %v1172 = vmax.f32 %v1060, 0.0
        %v1173 = vmax.f32 %v1125, 0.0
        %v1174 = vmax.f32 %v1063, 0.0
        %v1175 = vmax.f32 %v1128, 0.0
        %v1176 = vmax.f32 %v1066, 0.0
        %v1177 = vmax.f32 %v1131, 0.0
        %v1178 = vmax.f32 %v1069, 0.0
        %v1179 = vmax.f32 %v1134, 0.0
        %v1180 = vmax.f32 %v1072, 0.0
        %v1181 = vmax.f32 %v1137, 0.0
        %v1182 = vmax.f32 %v1075, 0.0
        %v1183 = vmax.f32 %v1140, 0.0
        %v1184 = vmax.f32 %v1078, 0.0
        %v1185 = vmax.f32 %v1143, 0.0
        %v1186 = vmax.f32 %v1081, 0.0
        %v1187 = vmax.f32 %v1146, 0.0
        %v1188 = vmax.f32 %v1084, 0.0
        %v1189 = vmax.f32 %v1149, 0.0
        %v1190 = vmax.f32 %v1087, 0.0
        %v1191 = vmax.f32 %v1152, 0.0
        %v1192 = vmax.f32 %v1090, 0.0
        %v1193 = vmax.f32 %v1155, 0.0
        %v1194 = vmax.f32 %v1093, 0.0
        %v1195 = vmax.f32 %v1158, 0.0
        %v1196 = vmax.f32 %v1096, 0.0
        %v1197 = vmax.f32 %v1161, 0.0
        %v1198 = vmax.f32 %v1099, 0.0
        %v1199 = vmax.f32 %v1164, 0.0
        %v1200 = vmax.f32 %v1102, 0.0
        %v1201 = vmax.f32 %v1167, 0.0
        %v1202 = vmax.f32 %v1105, 0.0
        %v1203 = vmax.f32 %v1170, 0.0
        %v1204 = vld [vmem:[%s9] sm:$0xff]
        %v1205 = vld [vmem:[%s9 + $0x8] sm:$0xff]
        %v1206 = vld [vmem:[%s9 + $0x10] sm:$0xff]
        %v1207 = vld [vmem:[%s9 + $0x18] sm:$0xff]
        %v1208 = vld [vmem:[%s9 + $0x20] sm:$0xff]
        %v1209 = vld [vmem:[%s9 + $0x28] sm:$0xff]
        %v1210 = vld [vmem:[%s9 + $0x30] sm:$0xff]
        %v1211 = vld [vmem:[%s9 + $0x38] sm:$0xff]
        %v1212 = vld [vmem:[%s9 + $0x40] sm:$0xff]
        %v1213 = vld [vmem:[%s9 + $0x48] sm:$0xff]
        %v1214 = vld [vmem:[%s9 + $0x50] sm:$0xff]
        %v1215 = vld [vmem:[%s9 + $0x58] sm:$0xff]
        %v1216 = vld [vmem:[%s9 + $0x60] sm:$0xff]
        %v1217 = vld [vmem:[%s9 + $0x68] sm:$0xff]
        %v1218 = vld [vmem:[%s9 + $0x70] sm:$0xff]
        %v1219 = vld [vmem:[%s9 + $0x78] sm:$0xff]
        %v1220 = vmin.f32 %v1060, 0.0
        %v1221 = vmin.f32 %v1125, 0.0
        %v1222 = vmin.f32 %v1063, 0.0
        %v1223 = vmin.f32 %v1128, 0.0
        %v1224 = vmin.f32 %v1066, 0.0
        %v1225 = vmin.f32 %v1131, 0.0
        %v1226 = vmin.f32 %v1069, 0.0
        %v1227 = vmin.f32 %v1134, 0.0
        %v1228 = vmin.f32 %v1072, 0.0
        %v1229 = vmin.f32 %v1137, 0.0
        %v1230 = vmin.f32 %v1075, 0.0
        %v1231 = vmin.f32 %v1140, 0.0
        %v1232 = vmin.f32 %v1078, 0.0
        %v1233 = vmin.f32 %v1143, 0.0
        %v1234 = vmin.f32 %v1081, 0.0
        %v1235 = vmin.f32 %v1146, 0.0
        %v1236 = vmin.f32 %v1084, 0.0
        %v1237 = vmin.f32 %v1149, 0.0
        %v1238 = vmin.f32 %v1087, 0.0
        %v1239 = vmin.f32 %v1152, 0.0
        %v1240 = vmin.f32 %v1090, 0.0
        %v1241 = vmin.f32 %v1155, 0.0
        %v1242 = vmin.f32 %v1093, 0.0
        %v1243 = vmin.f32 %v1158, 0.0
        %v1244 = vmin.f32 %v1096, 0.0
        %v1245 = vmin.f32 %v1161, 0.0
        %v1246 = vmin.f32 %v1099, 0.0
        %v1247 = vmin.f32 %v1164, 0.0
        %v1248 = vmin.f32 %v1102, 0.0
        %v1249 = vmin.f32 %v1167, 0.0
        %v1250 = vmin.f32 %v1105, 0.0
        %v1251 = vmin.f32 %v1170, 0.0
        %1253 = vset.pattern.permute.xlu0 0
        %1254 = vperm.xlu0 %1253, %v1204
        %v1255 = vpop.permute.xlu0 %1254
        %1258 = vset.pattern.permute.xlu0 0
        %1259 = vperm.xlu0 %1258, %v1205
        %v1260 = vpop.permute.xlu0 %1259
        %1263 = vset.pattern.permute.xlu0 0
        %1264 = vperm.xlu0 %1263, %v1206
        %v1265 = vpop.permute.xlu0 %1264
        %1268 = vset.pattern.permute.xlu0 0
        %1269 = vperm.xlu0 %1268, %v1207
        %v1270 = vpop.permute.xlu0 %1269
        %1273 = vset.pattern.permute.xlu0 0
        %1274 = vperm.xlu0 %1273, %v1208
        %v1275 = vpop.permute.xlu0 %1274
        %1278 = vset.pattern.permute.xlu0 0
        %1279 = vperm.xlu0 %1278, %v1209
        %v1280 = vpop.permute.xlu0 %1279
        %1283 = vset.pattern.permute.xlu0 0
        %1284 = vperm.xlu0 %1283, %v1210
        %v1285 = vpop.permute.xlu0 %1284
        %1288 = vset.pattern.permute.xlu0 0
        %1289 = vperm.xlu0 %1288, %v1211
        %v1290 = vpop.permute.xlu0 %1289
        %1293 = vset.pattern.permute.xlu0 0
        %1294 = vperm.xlu0 %1293, %v1212
        %v1295 = vpop.permute.xlu0 %1294
        %1298 = vset.pattern.permute.xlu0 0
        %1299 = vperm.xlu0 %1298, %v1213
        %v1300 = vpop.permute.xlu0 %1299
        %1303 = vset.pattern.permute.xlu0 0
        %1304 = vperm.xlu0 %1303, %v1214
        %v1305 = vpop.permute.xlu0 %1304
        %1308 = vset.pattern.permute.xlu0 0
        %1309 = vperm.xlu0 %1308, %v1215
        %v1310 = vpop.permute.xlu0 %1309
        %1313 = vset.pattern.permute.xlu0 0
        %1314 = vperm.xlu0 %1313, %v1216
        %v1315 = vpop.permute.xlu0 %1314
        %1318 = vset.pattern.permute.xlu0 0
        %1319 = vperm.xlu0 %1318, %v1217
        %v1320 = vpop.permute.xlu0 %1319
        %1323 = vset.pattern.permute.xlu0 0
        %1324 = vperm.xlu0 %1323, %v1218
        %v1325 = vpop.permute.xlu0 %1324
        %1328 = vset.pattern.permute.xlu0 0
        %1329 = vperm.xlu0 %1328, %v1219
        %v1330 = vpop.permute.xlu0 %1329
        %v1332 = vmul.f32 %v1255, %v1220
        %v1333 = vmul.f32 %v1255, %v1221
        %v1334 = vmul.f32 %v1260, %v1222
        %v1335 = vmul.f32 %v1260, %v1223
        %v1336 = vmul.f32 %v1265, %v1224
        %v1337 = vmul.f32 %v1265, %v1225
        %v1338 = vmul.f32 %v1270, %v1226
        %v1339 = vmul.f32 %v1270, %v1227
        %v1340 = vmul.f32 %v1275, %v1228
        %v1341 = vmul.f32 %v1275, %v1229
        %v1342 = vmul.f32 %v1280, %v1230
        %v1343 = vmul.f32 %v1280, %v1231
        %v1344 = vmul.f32 %v1285, %v1232
        %v1345 = vmul.f32 %v1285, %v1233
        %v1346 = vmul.f32 %v1290, %v1234
        %v1347 = vmul.f32 %v1290, %v1235
        %v1348 = vmul.f32 %v1295, %v1236
        %v1349 = vmul.f32 %v1295, %v1237
        %v1350 = vmul.f32 %v1300, %v1238
        %v1351 = vmul.f32 %v1300, %v1239
        %v1352 = vmul.f32 %v1305, %v1240
        %v1353 = vmul.f32 %v1305, %v1241
        %v1354 = vmul.f32 %v1310, %v1242
        %v1355 = vmul.f32 %v1310, %v1243
        %v1356 = vmul.f32 %v1315, %v1244
        %v1357 = vmul.f32 %v1315, %v1245
        %v1358 = vmul.f32 %v1320, %v1246
        %v1359 = vmul.f32 %v1320, %v1247
        %v1360 = vmul.f32 %v1325, %v1248
        %v1361 = vmul.f32 %v1325, %v1249
        %v1362 = vmul.f32 %v1330, %v1250
        %v1363 = vmul.f32 %v1330, %v1251
        %v1364 = vadd.f32 %v1172, %v1332
        %v1365 = vadd.f32 %v1173, %v1333
        %v1366 = vadd.f32 %v1174, %v1334
        %v1367 = vadd.f32 %v1175, %v1335
        %v1368 = vadd.f32 %v1176, %v1336
        %v1369 = vadd.f32 %v1177, %v1337
        %v1370 = vadd.f32 %v1178, %v1338
        %v1371 = vadd.f32 %v1179, %v1339
        %v1372 = vadd.f32 %v1180, %v1340
        %v1373 = vadd.f32 %v1181, %v1341
        %v1374 = vadd.f32 %v1182, %v1342
        %v1375 = vadd.f32 %v1183, %v1343
        %v1376 = vadd.f32 %v1184, %v1344
        %v1377 = vadd.f32 %v1185, %v1345
        %v1378 = vadd.f32 %v1186, %v1346
        %v1379 = vadd.f32 %v1187, %v1347
        %v1380 = vadd.f32 %v1188, %v1348
        %v1381 = vadd.f32 %v1189, %v1349
        %v1382 = vadd.f32 %v1190, %v1350
        %v1383 = vadd.f32 %v1191, %v1351
        %v1384 = vadd.f32 %v1192, %v1352
        %v1385 = vadd.f32 %v1193, %v1353
        %v1386 = vadd.f32 %v1194, %v1354
        %v1387 = vadd.f32 %v1195, %v1355
        %v1388 = vadd.f32 %v1196, %v1356
        %v1389 = vadd.f32 %v1197, %v1357
        %v1390 = vadd.f32 %v1198, %v1358
        %v1391 = vadd.f32 %v1199, %v1359
        %v1392 = vadd.f32 %v1200, %v1360
        %v1393 = vadd.f32 %v1201, %v1361
        %v1394 = vadd.f32 %v1202, %v1362
        %v1395 = vadd.f32 %v1203, %v1363
        %1396 = vst [vmem:[%s467] sm:$0xff] %v1364
        %1397 = vst [vmem:[%s467 + $0x8] sm:$0xff] %v1365
        %1398 = vst [vmem:[%s467 + $0x10] sm:$0xff] %v1366
        %1399 = vst [vmem:[%s467 + $0x18] sm:$0xff] %v1367
        %1400 = vst [vmem:[%s467 + $0x20] sm:$0xff] %v1368
        %1401 = vst [vmem:[%s467 + $0x28] sm:$0xff] %v1369
        %1402 = vst [vmem:[%s467 + $0x30] sm:$0xff] %v1370
        %1403 = vst [vmem:[%s467 + $0x38] sm:$0xff] %v1371
        %1404 = vst [vmem:[%s467 + $0x40] sm:$0xff] %v1372
        %1405 = vst [vmem:[%s467 + $0x48] sm:$0xff] %v1373
        %1406 = vst [vmem:[%s467 + $0x50] sm:$0xff] %v1374
        %1407 = vst [vmem:[%s467 + $0x58] sm:$0xff] %v1375
        %1408 = vst [vmem:[%s467 + $0x60] sm:$0xff] %v1376
        %1409 = vst [vmem:[%s467 + $0x68] sm:$0xff] %v1377
        %1410 = vst [vmem:[%s467 + $0x70] sm:$0xff] %v1378
        %1411 = vst [vmem:[%s467 + $0x78] sm:$0xff] %v1379
        %1412 = vst [vmem:[%s467 + $0x80] sm:$0xff] %v1380
        %1413 = vst [vmem:[%s467 + $0x88] sm:$0xff] %v1381
        %1414 = vst [vmem:[%s467 + $0x90] sm:$0xff] %v1382
        %1415 = vst [vmem:[%s467 + $0x98] sm:$0xff] %v1383
        %1416 = vst [vmem:[%s467 + $0xa0] sm:$0xff] %v1384
        %1417 = vst [vmem:[%s467 + $0xa8] sm:$0xff] %v1385
        %1418 = vst [vmem:[%s467 + $0xb0] sm:$0xff] %v1386
        %1419 = vst [vmem:[%s467 + $0xb8] sm:$0xff] %v1387
        %1420 = vst [vmem:[%s467 + $0xc0] sm:$0xff] %v1388
        %1421 = vst [vmem:[%s467 + $0xc8] sm:$0xff] %v1389
        %1422 = vst [vmem:[%s467 + $0xd0] sm:$0xff] %v1390
        %1423 = vst [vmem:[%s467 + $0xd8] sm:$0xff] %v1391
        %1424 = vst [vmem:[%s467 + $0xe0] sm:$0xff] %v1392
        %1425 = vst [vmem:[%s467 + $0xe8] sm:$0xff] %v1393
        %1426 = vst [vmem:[%s467 + $0xf0] sm:$0xff] %v1394
        %1427 = vst [vmem:[%s467 + $0xf8] sm:$0xff] %v1395
        %s1428 = sand.u32 %s273, 1
        %s1429 = scalar_lea.sflag [#allocation3], %s1428
        %s1430 = sand.u32 %s273, 1
        %s1431 = smul.addr %s1430, 256
        %s1432 = scalar_lea.vmem [#allocation11], %s1431
        // Predicated region
        $region81: #{tpu_custom_call.1} parent=59 // pred_check
          %p1433 = pneg %p283
        $region82: #{tpu_custom_call.1} parent=59 // pred_check_branch
          %1435 = sbr.rel (%p1433) target = $region84
        $region83: #{tpu_custom_call.1} parent=59 // pred_region
          %s1436 = smul.u32 2, %s32
          %1438 = vsyncadd %s1429, 0
          %s1439 = smul.addr %s31, 32
          %s1440 = sadd.s32 %s1436, %s1439
          %s1441 = smul.addr %s1440, 8
          %s1442 = scalar_lea.hbm %s10, %s1441
          %s1443 = sshll.u32 %s1432, 4
          %s1444 = int_to_ptr.vmem [resolvable:$true] %s1443
          %s1445 = sshll.u32 %s1442, 4
          %s1446 = int_to_ptr.hbm [resolvable:$true] %s1445
          %1451 = dma.vmem_to_hbm [thread:$0]  %s1444, 4096, %s1446, %s1429, 256, 256, 16
        $region84: #{tpu_custom_call.1} parent=59 // pred_fallthru
          _
      $region60: #{tpu_custom_call.1} parent=5 // pred_fallthru
        _
      %p1452 = scmp.le.s32.totalorder 2, %s22
      // Predicated region
      $region85: #{tpu_custom_call.1} parent=5 // pred_check
        %p1453 = pneg %p1452
      $region86: #{tpu_custom_call.1} parent=5 // pred_check_branch
        %1455 = sbr.rel (%p1453) target = $region88
      $region87: #{tpu_custom_call.1} parent=5 // pred_region
        %s1456 = ssub.s32 %s22, 2
        // Predicated region
        $region89: #{tpu_custom_call.1} parent=87 // pred_check
          %p1457 = pneg %p289
        $region90: #{tpu_custom_call.1} parent=87 // pred_check_branch
          %1459 = sbr.rel (%p1457) target = $region92
        $region91: #{tpu_custom_call.1} parent=87 // pred_region
          %s1460 = sand.u32 %s274, 1
          %s1461 = scalar_lea.sflag [#allocation3], %s1460
          %s1462 = sand.u32 %s274, 1
          %s1463 = smul.addr %s1462, 256
          %s1464 = scalar_lea.vmem [#allocation11], %s1463
          %1466 = dma.done %s1461, 4096
        $region92: #{tpu_custom_call.1} parent=87 // pred_fallthru
          _
      $region88: #{tpu_custom_call.1} parent=5 // pred_fallthru
        _
    $region6: #{tpu_custom_call.1} parent=1 // loop_footer
      %s26 = sadd.s32 1, %s22
    $region7: #{tpu_custom_call.1} parent=1 // loop_footer_branch
      %21 = sbr.rel target = $region3
    $region8: #{tpu_custom_call.1} parent=1 // loop_exit
      _
    %1467 = vsyncpa [#allocation3], 1
    %s1468 = scalar_lea.sflag [#allocation3], 1
    %1469 = vsyncpa %s1468, 1
    %1470 = vsyncpa [#allocation4], 1
    %s1471 = scalar_lea.sflag [#allocation4], 1
    %1472 = vsyncpa %s1471, 1
    %1473 = vsyncpa [#allocation6], 1
    %1474 = vsyncpa [#allocation9], 1

</llo_original>
